<compile_context>
chip_gen: v6e
topology: v6e:2x2x1
jax: 0.10.0
libtpu: 0.0.40
codegen_flags: <defaults>
</compile_context>

<pallas_src>
import functools

import jax
import jax.numpy as jnp
from jax.experimental import pallas as pl
from jax.experimental.pallas import tpu as pltpu

LEAK = 0.2
EPS = 1e-5


def _round_up(v, m):
    return (v + m - 1) // m * m


def _pick_batch_block(n, per_image_bytes, budget=4 << 20):
    """Largest divisor of n whose per-step working set fits the budget."""
    b = int(max(1, min(n, budget // max(per_image_bytes, 1))))
    while n % b:
        b -= 1
    return b


def _convblock_kernel(xf_ref, wf_ref, b_ref, g_ref, bt_ref, mask_ref,
                      o_ref, p_scr, sum_scr, ssq_scr,
                      *, cin_pad, wp, lwp, bblk, count, norm):
    """One grid step = one block of `bblk` images.

    xf_ref : (bblk, Cin_pad, Spad) bf16  zero-padded images, padded spatial
                                         flattened row-major over (Hp, Wp).
    wf_ref : (Cout, 9*Cin_pad)    bf16   wf[o,(kh*3+kw)*CP+c] = w[o,c,kh,kw]
    b_ref, g_ref, bt_ref : (Cout, 1) f32 conv bias / BN gamma / BN beta
    mask_ref : (1, bblk*LWP)      f32    1.0 on valid wide columns, else 0.0
    o_ref  : norm=True  -> (N, Cout, LWP) resident across the whole grid
             norm=False -> (bblk, Cout, LWP) streamed per step
    p_scr  : (9*Cin_pad, bblk*LWP) bf16  im2col scratch
    sum_scr, ssq_scr : (Cout, 1) f32     running per-channel sum / sum-sq
    """
    nb = pl.program_id(0)

    if norm:
        @pl.when(nb == 0)
        def _init():
            sum_scr[...] = jnp.zeros_like(sum_scr)
            ssq_scr[...] = jnp.zeros_like(ssq_scr)

    # im2col: each tap occupies a full sublane group (rows tap*CP..) and each
    # image a 128-multiple lane range, so every store is tile-aligned & dense.
    # (Further micro-opt: derive kw=1,2 from the kw=0 load via pltpu.roll.)
    for b in range(bblk):
        for kh in range(3):
            for kw in range(3):
                tap = kh * 3 + kw
                shift = kh * wp + kw
                p_scr[tap * cin_pad:(tap + 1) * cin_pad,
                      b * lwp:(b + 1) * lwp] = xf_ref[b, :, shift:shift + lwp]

    # Single bf16 MXU pass with f32 accumulation; lanes = bblk*LWP (dense).
    y = jnp.dot(wf_ref[...], p_scr[...], preferred_element_type=jnp.float32)
    y = y + b_ref[...]                        # conv bias, broadcast over lanes
    y = jnp.where(y >= 0, y, LEAK * y)        # LeakyReLU(0.2)

    if norm:
        # Batch-stat partials over VALID columns only (wide/pad cols are junk).
        # E[y^2]-E[y]^2 form in f32; fine for roughly standardized activations.
        yv = y * mask_ref[...]
        sum_scr[...] += jnp.sum(yv, axis=1, keepdims=True)
        ssq_scr[...] += jnp.sum(yv * yv, axis=1, keepdims=True)

    # Per-image lane-dense stores (LWP is a 128 multiple).
    for b in range(bblk):
        yb = y[:, b * lwp:(b + 1) * lwp]
        if norm:
            o_ref[pl.ds(nb * bblk + b, 1), :, :] = yb[None, :, :]
        else:
            o_ref[pl.ds(b, 1), :, :] = yb[None, :, :]

    if norm:
        @pl.when(nb == pl.num_programs(0) - 1)
        def _finalize():
            inv_cnt = 1.0 / float(count)
            mean = sum_scr[...] * inv_cnt                   # (Cout, 1)
            var = ssq_scr[...] * inv_cnt - mean * mean      # biased (training)
            inv = jax.lax.rsqrt(var + EPS)
            scale = g_ref[...] * inv                        # fold BN affine
            shift_ = bt_ref[...] - mean * scale             # into scale/shift
            o_ref[...] = o_ref[...] * scale[None, :, :] + shift_[None, :, :]


def conv_block(x_nchw, w_oihw, bias, gamma=None, beta=None, *, padding=1,
               norm=True):
    """Conv2d(3x3, padding) + LeakyReLU(0.2) + optional BatchNorm2d (batch stats).

    x_nchw: (N, Cin, H, W), w_oihw: (Cout, Cin, 3, 3). Returns (N, Cout, Ho, Wo).
    """
    x = x_nchw.astype(jnp.float32)
    w = w_oihw.astype(jnp.float32)
    N, Cin, H, W = x.shape
    Cout = w.shape[0]
    Hp, Wp = H + 2 * padding, W + 2 * padding
    Ho, Wo = Hp - 2, Wp - 2
    lw = Ho * Wp                               # valid "wide" flattened length
    LWP = _round_up(lw, 128)                   # lane-padded wide length
    CP = _round_up(Cin, 16)                    # bf16 sublane-tile channel pad
    Spad = _round_up(2 * Wp + 2 + LWP, 128)    # covers the largest tap window

    per_img = 9 * CP * LWP * 2 + 2 * CP * Spad * 2 + Cout * LWP * 4
    B = _pick_batch_block(N, per_img)
    nblk = N // B

    # Inputs: conv zero-padding + channel pad to CP + flat spatial pad to Spad.
    xp = jnp.pad(x, ((0, 0), (0, CP - Cin),
                     (padding, padding), (padding, padding)))
    xf = jnp.pad(xp.reshape(N, CP, Hp * Wp),
                 ((0, 0), (0, 0), (0, Spad - Hp * Wp))).astype(jnp.bfloat16)

    # Weights: OIHW -> (Cout, 9*CP); row order (kh, kw, c) matches the im2col.
    wpad = jnp.pad(w, ((0, 0), (0, CP - Cin), (0, 0), (0, 0)))
    wf = jnp.transpose(wpad, (0, 2, 3, 1)).reshape(Cout, 9 * CP)
    wf = wf.astype(jnp.bfloat16)

    b2 = bias.reshape(Cout, 1).astype(jnp.float32)
    if gamma is None:
        gamma = jnp.ones((Cout,), jnp.float32)
    if beta is None:
        beta = jnp.zeros((Cout,), jnp.float32)
    g2 = gamma.reshape(Cout, 1).astype(jnp.float32)
    bt2 = beta.reshape(Cout, 1).astype(jnp.float32)

    # 1.0 on valid columns of the padded wide (Ho, Wp) layout, tiled per image.
    col = jnp.arange(LWP, dtype=jnp.int32)
    valid = (col < lw) & ((col % Wp) < Wo)
    mask = jnp.tile(valid.astype(jnp.float32), B).reshape(1, B * LWP)

    kernel = functools.partial(
        _convblock_kernel, cin_pad=CP, wp=Wp, lwp=LWP, bblk=B,
        count=N * Ho * Wo, norm=norm)

    if norm:
        # Whole output resident in VMEM across the batch grid (BN needs global
        # batch stats before normalizing); written to HBM once.
        out_spec = pl.BlockSpec((N, Cout, LWP), lambda n: (0, 0, 0))
        dims = ("arbitrary",)
    else:
        # No cross-batch dependency -> stream per-block output, parallel axis.
        out_spec = pl.BlockSpec((B, Cout, LWP), lambda n: (n, 0, 0))
        dims = ("parallel",)

    # Scoped-VMEM budget: adapt to the resident output + scratch; cap so the
    # request stays inside v7x's 64 MiB physical VMEM per TensorCore.
    vmem_need = (N * Cout * LWP * 4 + 2 * B * CP * Spad * 2
                 + 9 * CP * B * LWP * 2 + (2 << 20))
    vmem_limit = max(32 << 20, min(_round_up(vmem_need, 1 << 20), 64 << 20))

    out_wide = pl.pallas_call(
        kernel,
        out_shape=jax.ShapeDtypeStruct((N, Cout, LWP), jnp.float32),
        grid_spec=pltpu.PrefetchScalarGridSpec(
            num_scalar_prefetch=0,
            grid=(nblk,),
            in_specs=[
                pl.BlockSpec((B, CP, Spad), lambda n: (n, 0, 0)),
                pl.BlockSpec((Cout, 9 * CP), lambda n: (0, 0)),
                pl.BlockSpec((Cout, 1), lambda n: (0, 0)),
                pl.BlockSpec((Cout, 1), lambda n: (0, 0)),
                pl.BlockSpec((Cout, 1), lambda n: (0, 0)),
                pl.BlockSpec((1, B * LWP), lambda n: (0, 0)),
            ],
            out_specs=out_spec,
            scratch_shapes=[
                pltpu.VMEM((9 * CP, B * LWP), jnp.bfloat16),  # im2col buffer
                pltpu.VMEM((Cout, 1), jnp.float32),           # running sum
                pltpu.VMEM((Cout, 1), jnp.float32),           # running sum-sq
            ]),
        compiler_params=pltpu.CompilerParams(
            dimension_semantics=dims,
            vmem_limit_bytes=vmem_limit),
    )(xf, wf, b2, g2, bt2, mask)

    # Drop lane padding and the junk wide columns; already NCHW.
    return out_wide[:, :, :lw].reshape(N, Cout, Ho, Wp)[:, :, :, :Wo]


def _reference(x, w, bias, gamma=None, beta=None, *, padding=1, norm=True):
    # Match the kernel's operand precision: bf16-rounded inputs, f32 math after.
    xb = x.astype(jnp.bfloat16).astype(jnp.float32)
    wb = w.astype(jnp.bfloat16).astype(jnp.float32)
    y = jax.lax.conv_general_dilated(
        xb, wb, (1, 1), [(padding, padding), (padding, padding)],
        dimension_numbers=("NCHW", "OIHW", "NCHW"))
    y = y + bias[None, :, None, None]
    y = jnp.where(y >= 0, y, LEAK * y)
    if norm:
        mean = y.mean(axis=(0, 2, 3), keepdims=True)
        var = y.var(axis=(0, 2, 3), keepdims=True)
        y = ((y - mean) * jax.lax.rsqrt(var + EPS)
             * gamma[None, :, None, None] + beta[None, :, None, None])
    return y


if __name__ == "__main__":
    key = jax.random.PRNGKey(0)
    k_x, k_w, k_b, k_g, k_bt = jax.random.split(key, 5)

    N, Cin, Cout, H, W = 2, 4, 8, 16, 16

    x = jax.random.normal(k_x, (N, Cin, H, W), dtype=jnp.float32)
    w = 0.1 * jax.random.normal(k_w, (Cout, Cin, 3, 3), dtype=jnp.float32)
    b = 0.1 * jax.random.normal(k_b, (Cout,), dtype=jnp.float32)
    gamma = 1.0 + 0.1 * jax.random.normal(k_g, (Cout,), dtype=jnp.float32)
    beta = 0.1 * jax.random.normal(k_bt, (Cout,), dtype=jnp.float32)

    # norm=True (Conv + LeakyReLU + BatchNorm)
    out = conv_block(x, w, b, gamma, beta, padding=1, norm=True)
    out = jax.block_until_ready(out)
    ref = _reference(x, w, b, gamma, beta, padding=1, norm=True)
    if out.shape != ref.shape:
        raise AssertionError(f"shape mismatch {out.shape} vs {ref.shape}")
    if not bool(jnp.allclose(out, ref, rtol=2e-3, atol=2e-3)):
        err = float(jnp.max(jnp.abs(out - ref)))
        raise AssertionError(
            f"Pallas ConvBlock (norm=True) mismatch vs reference "
            f"(max abs err {err})")

    # norm=False (Conv + LeakyReLU only)
    out2 = conv_block(x, w, b, padding=1, norm=False)
    out2 = jax.block_until_ready(out2)
    ref2 = _reference(x, w, b, padding=1, norm=False)
    if not bool(jnp.allclose(out2, ref2, rtol=2e-3, atol=2e-3)):
        err = float(jnp.max(jnp.abs(out2 - ref2)))
        raise AssertionError(
            f"Pallas ConvBlock (norm=False) mismatch vs reference "
            f"(max abs err {err})")

    print("KERNEL_OK")
</pallas_src>

<mosaic_0001>
module attributes {stable_mosaic.version = 11 : i64} {
  func.func @_convblock_kernel(%arg0: i32, %arg1: memref<2x16x512xbf16, #tpu.memory_space<vmem>>, %arg2: memref<8x144xbf16, #tpu.memory_space<vmem>>, %arg3: memref<8x1xf32, #tpu.memory_space<vmem>>, %arg4: memref<8x1xf32, #tpu.memory_space<vmem>>, %arg5: memref<8x1xf32, #tpu.memory_space<vmem>>, %arg6: memref<1x768xf32, #tpu.memory_space<vmem>>, %arg7: memref<2x8x384xf32, #tpu.memory_space<vmem>>, %arg8: memref<144x768xbf16, #tpu.memory_space<vmem>>, %arg9: memref<8x1xf32, #tpu.memory_space<vmem>>, %arg10: memref<8x1xf32, #tpu.memory_space<vmem>>) attributes {dimension_semantics = [#tpu.dimension_semantics<arbitrary>], iteration_bounds = array<i64: 1>, scalar_prefetch = 0 : i64, scratch_operands = 3 : i64, tpu.core_type = #tpu.core_type<tc>, window_params = [{transform_indices = @transform_0, window_bounds = array<i64: 2, 16, 512>}, {pipeline_mode = #tpu.pipeline_mode<synchronous>, transform_indices = @transform_1, window_bounds = array<i64: 8, 144>}, {pipeline_mode = #tpu.pipeline_mode<synchronous>, transform_indices = @transform_2, window_bounds = array<i64: 8, 1>}, {pipeline_mode = #tpu.pipeline_mode<synchronous>, transform_indices = @transform_3, window_bounds = array<i64: 8, 1>}, {pipeline_mode = #tpu.pipeline_mode<synchronous>, transform_indices = @transform_4, window_bounds = array<i64: 8, 1>}, {pipeline_mode = #tpu.pipeline_mode<synchronous>, transform_indices = @transform_5, window_bounds = array<i64: 1, 768>}, {pipeline_mode = #tpu.pipeline_mode<synchronous>, transform_indices = @transform_6, window_bounds = array<i64: 2, 8, 384>}]} {
    %c0_i32 = arith.constant 0 : i32
    %0 = arith.cmpi eq, %arg0, %c0_i32 : i32
    %1 = arith.extui %0 : i1 to i32
    %c0_i32_0 = arith.constant 0 : i32
    %2 = arith.cmpi ne, %1, %c0_i32_0 : i32
    scf.if %2 {
      %cst_101 = arith.constant 0.000000e+00 : f32
      %97 = vector.broadcast %cst_101 : f32 to vector<8x1xf32>
      %c0_102 = arith.constant 0 : index
      %c0_103 = arith.constant 0 : index
      %98 = vector.load %arg9[%c0_102, %c0_103] : memref<8x1xf32, #tpu.memory_space<vmem>>, vector<8x1xf32>
      tpu.vector_store %arg9[%c0_102, %c0_103], %97 {strides = array<i32>} : memref<8x1xf32, #tpu.memory_space<vmem>>, vector<8x1xf32>,
      %cst_104 = arith.constant 0.000000e+00 : f32
      %99 = vector.broadcast %cst_104 : f32 to vector<8x1xf32>
      %c0_105 = arith.constant 0 : index
      %c0_106 = arith.constant 0 : index
      %100 = vector.load %arg10[%c0_105, %c0_106] : memref<8x1xf32, #tpu.memory_space<vmem>>, vector<8x1xf32>
      tpu.vector_store %arg10[%c0_105, %c0_106], %99 {strides = array<i32>} : memref<8x1xf32, #tpu.memory_space<vmem>>, vector<8x1xf32>,
    } else {
    }
    %c0 = arith.constant 0 : index
    %c0_1 = arith.constant 0 : index
    %c0_2 = arith.constant 0 : index
    %3 = vector.load %arg1[%c0, %c0_1, %c0_2] : memref<2x16x512xbf16, #tpu.memory_space<vmem>>, vector<1x16x384xbf16>
    %4 = vector.shape_cast %3 : vector<1x16x384xbf16> to vector<16x384xbf16>
    %c0_3 = arith.constant 0 : index
    %c0_4 = arith.constant 0 : index
    %5 = vector.load %arg8[%c0_3, %c0_4] : memref<144x768xbf16, #tpu.memory_space<vmem>>, vector<16x384xbf16>
    tpu.vector_store %arg8[%c0_3, %c0_4], %4 {strides = array<i32>} : memref<144x768xbf16, #tpu.memory_space<vmem>>, vector<16x384xbf16>,
    %c0_5 = arith.constant 0 : index
    %c0_6 = arith.constant 0 : index
    %c1 = arith.constant 1 : index
    %6 = vector.load %arg1[%c0_5, %c0_6, %c1] : memref<2x16x512xbf16, #tpu.memory_space<vmem>>, vector<1x16x384xbf16>
    %7 = vector.shape_cast %6 : vector<1x16x384xbf16> to vector<16x384xbf16>
    %c16 = arith.constant 16 : index
    %c0_7 = arith.constant 0 : index
    %8 = vector.load %arg8[%c16, %c0_7] : memref<144x768xbf16, #tpu.memory_space<vmem>>, vector<16x384xbf16>
    tpu.vector_store %arg8[%c16, %c0_7], %7 {strides = array<i32>} : memref<144x768xbf16, #tpu.memory_space<vmem>>, vector<16x384xbf16>,
    %c0_8 = arith.constant 0 : index
    %c0_9 = arith.constant 0 : index
    %c2 = arith.constant 2 : index
    %9 = vector.load %arg1[%c0_8, %c0_9, %c2] : memref<2x16x512xbf16, #tpu.memory_space<vmem>>, vector<1x16x384xbf16>
    %10 = vector.shape_cast %9 : vector<1x16x384xbf16> to vector<16x384xbf16>
    %c32 = arith.constant 32 : index
    %c0_10 = arith.constant 0 : index
    %11 = vector.load %arg8[%c32, %c0_10] : memref<144x768xbf16, #tpu.memory_space<vmem>>, vector<16x384xbf16>
    tpu.vector_store %arg8[%c32, %c0_10], %10 {strides = array<i32>} : memref<144x768xbf16, #tpu.memory_space<vmem>>, vector<16x384xbf16>,
    %c0_11 = arith.constant 0 : index
    %c0_12 = arith.constant 0 : index
    %c18 = arith.constant 18 : index
    %12 = vector.load %arg1[%c0_11, %c0_12, %c18] : memref<2x16x512xbf16, #tpu.memory_space<vmem>>, vector<1x16x384xbf16>
    %13 = vector.shape_cast %12 : vector<1x16x384xbf16> to vector<16x384xbf16>
    %c48 = arith.constant 48 : index
    %c0_13 = arith.constant 0 : index
    %14 = vector.load %arg8[%c48, %c0_13] : memref<144x768xbf16, #tpu.memory_space<vmem>>, vector<16x384xbf16>
    tpu.vector_store %arg8[%c48, %c0_13], %13 {strides = array<i32>} : memref<144x768xbf16, #tpu.memory_space<vmem>>, vector<16x384xbf16>,
    %c0_14 = arith.constant 0 : index
    %c0_15 = arith.constant 0 : index
    %c19 = arith.constant 19 : index
    %15 = vector.load %arg1[%c0_14, %c0_15, %c19] : memref<2x16x512xbf16, #tpu.memory_space<vmem>>, vector<1x16x384xbf16>
    %16 = vector.shape_cast %15 : vector<1x16x384xbf16> to vector<16x384xbf16>
    %c64 = arith.constant 64 : index
    %c0_16 = arith.constant 0 : index
    %17 = vector.load %arg8[%c64, %c0_16] : memref<144x768xbf16, #tpu.memory_space<vmem>>, vector<16x384xbf16>
    tpu.vector_store %arg8[%c64, %c0_16], %16 {strides = array<i32>} : memref<144x768xbf16, #tpu.memory_space<vmem>>, vector<16x384xbf16>,
    %c0_17 = arith.constant 0 : index
    %c0_18 = arith.constant 0 : index
    %c20 = arith.constant 20 : index
    %18 = vector.load %arg1[%c0_17, %c0_18, %c20] : memref<2x16x512xbf16, #tpu.memory_space<vmem>>, vector<1x16x384xbf16>
    %19 = vector.shape_cast %18 : vector<1x16x384xbf16> to vector<16x384xbf16>
    %c80 = arith.constant 80 : index
    %c0_19 = arith.constant 0 : index
    %20 = vector.load %arg8[%c80, %c0_19] : memref<144x768xbf16, #tpu.memory_space<vmem>>, vector<16x384xbf16>
    tpu.vector_store %arg8[%c80, %c0_19], %19 {strides = array<i32>} : memref<144x768xbf16, #tpu.memory_space<vmem>>, vector<16x384xbf16>,
    %c0_20 = arith.constant 0 : index
    %c0_21 = arith.constant 0 : index
    %c36 = arith.constant 36 : index
    %21 = vector.load %arg1[%c0_20, %c0_21, %c36] : memref<2x16x512xbf16, #tpu.memory_space<vmem>>, vector<1x16x384xbf16>
    %22 = vector.shape_cast %21 : vector<1x16x384xbf16> to vector<16x384xbf16>
    %c96 = arith.constant 96 : index
    %c0_22 = arith.constant 0 : index
    %23 = vector.load %arg8[%c96, %c0_22] : memref<144x768xbf16, #tpu.memory_space<vmem>>, vector<16x384xbf16>
    tpu.vector_store %arg8[%c96, %c0_22], %22 {strides = array<i32>} : memref<144x768xbf16, #tpu.memory_space<vmem>>, vector<16x384xbf16>,
    %c0_23 = arith.constant 0 : index
    %c0_24 = arith.constant 0 : index
    %c37 = arith.constant 37 : index
    %24 = vector.load %arg1[%c0_23, %c0_24, %c37] : memref<2x16x512xbf16, #tpu.memory_space<vmem>>, vector<1x16x384xbf16>
    %25 = vector.shape_cast %24 : vector<1x16x384xbf16> to vector<16x384xbf16>
    %c112 = arith.constant 112 : index
    %c0_25 = arith.constant 0 : index
    %26 = vector.load %arg8[%c112, %c0_25] : memref<144x768xbf16, #tpu.memory_space<vmem>>, vector<16x384xbf16>
    tpu.vector_store %arg8[%c112, %c0_25], %25 {strides = array<i32>} : memref<144x768xbf16, #tpu.memory_space<vmem>>, vector<16x384xbf16>,
    %c0_26 = arith.constant 0 : index
    %c0_27 = arith.constant 0 : index
    %c38 = arith.constant 38 : index
    %27 = vector.load %arg1[%c0_26, %c0_27, %c38] : memref<2x16x512xbf16, #tpu.memory_space<vmem>>, vector<1x16x384xbf16>
    %28 = vector.shape_cast %27 : vector<1x16x384xbf16> to vector<16x384xbf16>
    %c128 = arith.constant 128 : index
    %c0_28 = arith.constant 0 : index
    %29 = vector.load %arg8[%c128, %c0_28] : memref<144x768xbf16, #tpu.memory_space<vmem>>, vector<16x384xbf16>
    tpu.vector_store %arg8[%c128, %c0_28], %28 {strides = array<i32>} : memref<144x768xbf16, #tpu.memory_space<vmem>>, vector<16x384xbf16>,
    %c1_29 = arith.constant 1 : index
    %c0_30 = arith.constant 0 : index
    %c0_31 = arith.constant 0 : index
    %30 = vector.load %arg1[%c1_29, %c0_30, %c0_31] : memref<2x16x512xbf16, #tpu.memory_space<vmem>>, vector<1x16x384xbf16>
    %31 = vector.shape_cast %30 : vector<1x16x384xbf16> to vector<16x384xbf16>
    %c0_32 = arith.constant 0 : index
    %c384 = arith.constant 384 : index
    %32 = vector.load %arg8[%c0_32, %c384] : memref<144x768xbf16, #tpu.memory_space<vmem>>, vector<16x384xbf16>
    tpu.vector_store %arg8[%c0_32, %c384], %31 {strides = array<i32>} : memref<144x768xbf16, #tpu.memory_space<vmem>>, vector<16x384xbf16>,
    %c1_33 = arith.constant 1 : index
    %c0_34 = arith.constant 0 : index
    %c1_35 = arith.constant 1 : index
    %33 = vector.load %arg1[%c1_33, %c0_34, %c1_35] : memref<2x16x512xbf16, #tpu.memory_space<vmem>>, vector<1x16x384xbf16>
    %34 = vector.shape_cast %33 : vector<1x16x384xbf16> to vector<16x384xbf16>
    %c16_36 = arith.constant 16 : index
    %c384_37 = arith.constant 384 : index
    %35 = vector.load %arg8[%c16_36, %c384_37] : memref<144x768xbf16, #tpu.memory_space<vmem>>, vector<16x384xbf16>
    tpu.vector_store %arg8[%c16_36, %c384_37], %34 {strides = array<i32>} : memref<144x768xbf16, #tpu.memory_space<vmem>>, vector<16x384xbf16>,
    %c1_38 = arith.constant 1 : index
    %c0_39 = arith.constant 0 : index
    %c2_40 = arith.constant 2 : index
    %36 = vector.load %arg1[%c1_38, %c0_39, %c2_40] : memref<2x16x512xbf16, #tpu.memory_space<vmem>>, vector<1x16x384xbf16>
    %37 = vector.shape_cast %36 : vector<1x16x384xbf16> to vector<16x384xbf16>
    %c32_41 = arith.constant 32 : index
    %c384_42 = arith.constant 384 : index
    %38 = vector.load %arg8[%c32_41, %c384_42] : memref<144x768xbf16, #tpu.memory_space<vmem>>, vector<16x384xbf16>
    tpu.vector_store %arg8[%c32_41, %c384_42], %37 {strides = array<i32>} : memref<144x768xbf16, #tpu.memory_space<vmem>>, vector<16x384xbf16>,
    %c1_43 = arith.constant 1 : index
    %c0_44 = arith.constant 0 : index
    %c18_45 = arith.constant 18 : index
    %39 = vector.load %arg1[%c1_43, %c0_44, %c18_45] : memref<2x16x512xbf16, #tpu.memory_space<vmem>>, vector<1x16x384xbf16>
    %40 = vector.shape_cast %39 : vector<1x16x384xbf16> to vector<16x384xbf16>
    %c48_46 = arith.constant 48 : index
    %c384_47 = arith.constant 384 : index
    %41 = vector.load %arg8[%c48_46, %c384_47] : memref<144x768xbf16, #tpu.memory_space<vmem>>, vector<16x384xbf16>
    tpu.vector_store %arg8[%c48_46, %c384_47], %40 {strides = array<i32>} : memref<144x768xbf16, #tpu.memory_space<vmem>>, vector<16x384xbf16>,
    %c1_48 = arith.constant 1 : index
    %c0_49 = arith.constant 0 : index
    %c19_50 = arith.constant 19 : index
    %42 = vector.load %arg1[%c1_48, %c0_49, %c19_50] : memref<2x16x512xbf16, #tpu.memory_space<vmem>>, vector<1x16x384xbf16>
    %43 = vector.shape_cast %42 : vector<1x16x384xbf16> to vector<16x384xbf16>
    %c64_51 = arith.constant 64 : index
    %c384_52 = arith.constant 384 : index
    %44 = vector.load %arg8[%c64_51, %c384_52] : memref<144x768xbf16, #tpu.memory_space<vmem>>, vector<16x384xbf16>
    tpu.vector_store %arg8[%c64_51, %c384_52], %43 {strides = array<i32>} : memref<144x768xbf16, #tpu.memory_space<vmem>>, vector<16x384xbf16>,
    %c1_53 = arith.constant 1 : index
    %c0_54 = arith.constant 0 : index
    %c20_55 = arith.constant 20 : index
    %45 = vector.load %arg1[%c1_53, %c0_54, %c20_55] : memref<2x16x512xbf16, #tpu.memory_space<vmem>>, vector<1x16x384xbf16>
    %46 = vector.shape_cast %45 : vector<1x16x384xbf16> to vector<16x384xbf16>
    %c80_56 = arith.constant 80 : index
    %c384_57 = arith.constant 384 : index
    %47 = vector.load %arg8[%c80_56, %c384_57] : memref<144x768xbf16, #tpu.memory_space<vmem>>, vector<16x384xbf16>
    tpu.vector_store %arg8[%c80_56, %c384_57], %46 {strides = array<i32>} : memref<144x768xbf16, #tpu.memory_space<vmem>>, vector<16x384xbf16>,
    %c1_58 = arith.constant 1 : index
    %c0_59 = arith.constant 0 : index
    %c36_60 = arith.constant 36 : index
    %48 = vector.load %arg1[%c1_58, %c0_59, %c36_60] : memref<2x16x512xbf16, #tpu.memory_space<vmem>>, vector<1x16x384xbf16>
    %49 = vector.shape_cast %48 : vector<1x16x384xbf16> to vector<16x384xbf16>
    %c96_61 = arith.constant 96 : index
    %c384_62 = arith.constant 384 : index
    %50 = vector.load %arg8[%c96_61, %c384_62] : memref<144x768xbf16, #tpu.memory_space<vmem>>, vector<16x384xbf16>
    tpu.vector_store %arg8[%c96_61, %c384_62], %49 {strides = array<i32>} : memref<144x768xbf16, #tpu.memory_space<vmem>>, vector<16x384xbf16>,
    %c1_63 = arith.constant 1 : index
    %c0_64 = arith.constant 0 : index
    %c37_65 = arith.constant 37 : index
    %51 = vector.load %arg1[%c1_63, %c0_64, %c37_65] : memref<2x16x512xbf16, #tpu.memory_space<vmem>>, vector<1x16x384xbf16>
    %52 = vector.shape_cast %51 : vector<1x16x384xbf16> to vector<16x384xbf16>
    %c112_66 = arith.constant 112 : index
    %c384_67 = arith.constant 384 : index
    %53 = vector.load %arg8[%c112_66, %c384_67] : memref<144x768xbf16, #tpu.memory_space<vmem>>, vector<16x384xbf16>
    tpu.vector_store %arg8[%c112_66, %c384_67], %52 {strides = array<i32>} : memref<144x768xbf16, #tpu.memory_space<vmem>>, vector<16x384xbf16>,
    %c1_68 = arith.constant 1 : index
    %c0_69 = arith.constant 0 : index
    %c38_70 = arith.constant 38 : index
    %54 = vector.load %arg1[%c1_68, %c0_69, %c38_70] : memref<2x16x512xbf16, #tpu.memory_space<vmem>>, vector<1x16x384xbf16>
    %55 = vector.shape_cast %54 : vector<1x16x384xbf16> to vector<16x384xbf16>
    %c128_71 = arith.constant 128 : index
    %c384_72 = arith.constant 384 : index
    %56 = vector.load %arg8[%c128_71, %c384_72] : memref<144x768xbf16, #tpu.memory_space<vmem>>, vector<16x384xbf16>
    tpu.vector_store %arg8[%c128_71, %c384_72], %55 {strides = array<i32>} : memref<144x768xbf16, #tpu.memory_space<vmem>>, vector<16x384xbf16>,
    %c0_73 = arith.constant 0 : index
    %c0_74 = arith.constant 0 : index
    %57 = vector.load %arg2[%c0_73, %c0_74] : memref<8x144xbf16, #tpu.memory_space<vmem>>, vector<8x144xbf16>
    %c0_75 = arith.constant 0 : index
    %c0_76 = arith.constant 0 : index
    %58 = vector.load %arg8[%c0_75, %c0_76] : memref<144x768xbf16, #tpu.memory_space<vmem>>, vector<144x768xbf16>
    %cst = arith.constant dense<0.000000e+00> : vector<8x768xf32>
    %59 = tpu.matmul %57, %58, %cst {dimension_numbers = #tpu.dot_dimension_numbers<[1], [0], [0], [1], [0, 0, 1, 1], [], []>} : vector<8x144xbf16>, vector<144x768xbf16>, vector<8x768xf32> -> vector<8x768xf32>
    %c0_77 = arith.constant 0 : index
    %c0_78 = arith.constant 0 : index
    %60 = vector.load %arg3[%c0_77, %c0_78] : memref<8x1xf32, #tpu.memory_space<vmem>>, vector<8x1xf32>
    %61 = vector.broadcast %60 : vector<8x1xf32> to vector<8x768xf32>
    %62 = arith.addf %59, %61 : vector<8x768xf32>
    %cst_79 = arith.constant 0.000000e+00 : f32
    %63 = vector.broadcast %cst_79 : f32 to vector<8x768xf32>
    %64 = arith.cmpf oge, %62, %63 : vector<8x768xf32>
    %cst_80 = arith.constant 2.000000e-01 : f32
    %65 = vector.broadcast %cst_80 : f32 to vector<8x768xf32>
    %66 = arith.mulf %65, %62 : vector<8x768xf32>
    %67 = arith.select %64, %62, %66 : vector<8x768xi1>, vector<8x768xf32>
    %c0_81 = arith.constant 0 : index
    %c0_82 = arith.constant 0 : index
    %68 = vector.load %arg6[%c0_81, %c0_82] : memref<1x768xf32, #tpu.memory_space<vmem>>, vector<1x768xf32>
    %69 = vector.broadcast %68 : vector<1x768xf32> to vector<8x768xf32>
    %70 = arith.mulf %67, %69 : vector<8x768xf32>
    %c0_83 = arith.constant 0 : index
    %c0_84 = arith.constant 0 : index
    %71 = vector.load %arg9[%c0_83, %c0_84] : memref<8x1xf32, #tpu.memory_space<vmem>>, vector<8x1xf32>
    %cst_85 = arith.constant dense<0.000000e+00> : vector<8xf32>
    %72 = vector.multi_reduction <add>, %70, %cst_85 [1] : vector<8x768xf32> to vector<8xf32>
    %73 = vector.shape_cast %72 : vector<8xf32> to vector<8x1xf32>
    %74 = arith.addf %71, %73 : vector<8x1xf32>
    %c0_86 = arith.constant 0 : index
    %c0_87 = arith.constant 0 : index
    %75 = vector.load %arg9[%c0_86, %c0_87] : memref<8x1xf32, #tpu.memory_space<vmem>>, vector<8x1xf32>
    tpu.vector_store %arg9[%c0_86, %c0_87], %74 {strides = array<i32>} : memref<8x1xf32, #tpu.memory_space<vmem>>, vector<8x1xf32>,
    %c0_88 = arith.constant 0 : index
    %c0_89 = arith.constant 0 : index
    %76 = vector.load %arg10[%c0_88, %c0_89] : memref<8x1xf32, #tpu.memory_space<vmem>>, vector<8x1xf32>
    %77 = arith.mulf %70, %70 : vector<8x768xf32>
    %cst_90 = arith.constant dense<0.000000e+00> : vector<8xf32>
    %78 = vector.multi_reduction <add>, %77, %cst_90 [1] : vector<8x768xf32> to vector<8xf32>
    %79 = vector.shape_cast %78 : vector<8xf32> to vector<8x1xf32>
    %80 = arith.addf %76, %79 : vector<8x1xf32>
    %c0_91 = arith.constant 0 : index
    %c0_92 = arith.constant 0 : index
    %81 = vector.load %arg10[%c0_91, %c0_92] : memref<8x1xf32, #tpu.memory_space<vmem>>, vector<8x1xf32>
    tpu.vector_store %arg10[%c0_91, %c0_92], %80 {strides = array<i32>} : memref<8x1xf32, #tpu.memory_space<vmem>>, vector<8x1xf32>,
    %82 = vector.extract_strided_slice %67 {offsets = [0, 0], sizes = [8, 384], strides = [1, 1]} : vector<8x768xf32> to vector<8x384xf32>
    %83 = vector.shape_cast %82 : vector<8x384xf32> to vector<1x8x384xf32>
    %c2_i32 = arith.constant 2 : i32
    %84 = arith.muli %arg0, %c2_i32 : i32
    %c0_i32_93 = arith.constant 0 : i32
    %85 = arith.addi %84, %c0_i32_93 : i32
    %86 = arith.index_cast %85 : i32 to index
    %c0_94 = arith.constant 0 : index
    %c0_95 = arith.constant 0 : index
    %87 = vector.load %arg7[%86, %c0_94, %c0_95] : memref<2x8x384xf32, #tpu.memory_space<vmem>>, vector<1x8x384xf32>
    tpu.vector_store %arg7[%86, %c0_94, %c0_95], %83 {strides = array<i32>} : memref<2x8x384xf32, #tpu.memory_space<vmem>>, vector<1x8x384xf32>,
    %88 = vector.extract_strided_slice %67 {offsets = [0, 384], sizes = [8, 384], strides = [1, 1]} : vector<8x768xf32> to vector<8x384xf32>
    %89 = vector.shape_cast %88 : vector<8x384xf32> to vector<1x8x384xf32>
    %c2_i32_96 = arith.constant 2 : i32
    %90 = arith.muli %arg0, %c2_i32_96 : i32
    %c1_i32 = arith.constant 1 : i32
    %91 = arith.addi %90, %c1_i32 : i32
    %92 = arith.index_cast %91 : i32 to index
    %c0_97 = arith.constant 0 : index
    %c0_98 = arith.constant 0 : index
    %93 = vector.load %arg7[%92, %c0_97, %c0_98] : memref<2x8x384xf32, #tpu.memory_space<vmem>>, vector<1x8x384xf32>
    tpu.vector_store %arg7[%92, %c0_97, %c0_98], %89 {strides = array<i32>} : memref<2x8x384xf32, #tpu.memory_space<vmem>>, vector<1x8x384xf32>,
    %c0_i32_99 = arith.constant 0 : i32
    %94 = arith.cmpi eq, %arg0, %c0_i32_99 : i32
    %95 = arith.extui %94 : i1 to i32
    %c0_i32_100 = arith.constant 0 : i32
    %96 = arith.cmpi ne, %95, %c0_i32_100 : i32
    scf.if %96 {
      %c0_101 = arith.constant 0 : index
      %c0_102 = arith.constant 0 : index
      %97 = vector.load %arg9[%c0_101, %c0_102] : memref<8x1xf32, #tpu.memory_space<vmem>>, vector<8x1xf32>
      %cst_103 = arith.constant 0.001953125 : f32
      %98 = vector.broadcast %cst_103 : f32 to vector<8x1xf32>
      %99 = arith.mulf %97, %98 : vector<8x1xf32>
      %c0_104 = arith.constant 0 : index
      %c0_105 = arith.constant 0 : index
      %100 = vector.load %arg10[%c0_104, %c0_105] : memref<8x1xf32, #tpu.memory_space<vmem>>, vector<8x1xf32>
      %cst_106 = arith.constant 0.001953125 : f32
      %101 = vector.broadcast %cst_106 : f32 to vector<8x1xf32>
      %102 = arith.mulf %100, %101 : vector<8x1xf32>
      %103 = arith.mulf %99, %99 : vector<8x1xf32>
      %104 = arith.subf %102, %103 : vector<8x1xf32>
      %cst_107 = arith.constant 9.99999974E-6 : f32
      %105 = vector.broadcast %cst_107 : f32 to vector<8x1xf32>
      %106 = arith.addf %104, %105 : vector<8x1xf32>
      %107 = math.rsqrt %106 : vector<8x1xf32>
      %c0_108 = arith.constant 0 : index
      %c0_109 = arith.constant 0 : index
      %108 = vector.load %arg4[%c0_108, %c0_109] : memref<8x1xf32, #tpu.memory_space<vmem>>, vector<8x1xf32>
      %109 = arith.mulf %108, %107 : vector<8x1xf32>
      %c0_110 = arith.constant 0 : index
      %c0_111 = arith.constant 0 : index
      %110 = vector.load %arg5[%c0_110, %c0_111] : memref<8x1xf32, #tpu.memory_space<vmem>>, vector<8x1xf32>
      %111 = arith.mulf %99, %109 : vector<8x1xf32>
      %112 = arith.subf %110, %111 : vector<8x1xf32>
      %c0_112 = arith.constant 0 : index
      %c0_113 = arith.constant 0 : index
      %c0_114 = arith.constant 0 : index
      %113 = vector.load %arg7[%c0_112, %c0_113, %c0_114] : memref<2x8x384xf32, #tpu.memory_space<vmem>>, vector<2x8x384xf32>
      %114 = vector.shape_cast %109 : vector<8x1xf32> to vector<1x8x1xf32>
      %115 = vector.broadcast %114 : vector<1x8x1xf32> to vector<2x8x384xf32>
      %116 = arith.mulf %113, %115 : vector<2x8x384xf32>
      %117 = vector.shape_cast %112 : vector<8x1xf32> to vector<1x8x1xf32>
      %118 = vector.broadcast %117 : vector<1x8x1xf32> to vector<2x8x384xf32>
      %119 = arith.addf %116, %118 : vector<2x8x384xf32>
      %c0_115 = arith.constant 0 : index
      %c0_116 = arith.constant 0 : index
      %c0_117 = arith.constant 0 : index
      %120 = vector.load %arg7[%c0_115, %c0_116, %c0_117] : memref<2x8x384xf32, #tpu.memory_space<vmem>>, vector<2x8x384xf32>
      tpu.vector_store %arg7[%c0_115, %c0_116, %c0_117], %119 {strides = array<i32>} : memref<2x8x384xf32, #tpu.memory_space<vmem>>, vector<2x8x384xf32>,
    } else {
    }
    return
  }
  func.func @transform_0(%arg0: i32) -> (i32, i32, i32) {
    %c0_i32 = arith.constant 0 : i32
    %c0_i32_0 = arith.constant 0 : i32
    %c0_i32_1 = arith.constant 0 : i32
    return %arg0, %c0_i32, %c0_i32_0 : i32, i32, i32
  }
  func.func @transform_1(%arg0: i32) -> (i32, i32) {
    %c0_i32 = arith.constant 0 : i32
    %c0_i32_0 = arith.constant 0 : i32
    %c0_i32_1 = arith.constant 0 : i32
    return %c0_i32, %c0_i32_0 : i32, i32
  }
  func.func @transform_2(%arg0: i32) -> (i32, i32) {
    %c0_i32 = arith.constant 0 : i32
    %c0_i32_0 = arith.constant 0 : i32
    %c0_i32_1 = arith.constant 0 : i32
    return %c0_i32, %c0_i32_0 : i32, i32
  }
  func.func @transform_3(%arg0: i32) -> (i32, i32) {
    %c0_i32 = arith.constant 0 : i32
    %c0_i32_0 = arith.constant 0 : i32
    %c0_i32_1 = arith.constant 0 : i32
    return %c0_i32, %c0_i32_0 : i32, i32
  }
  func.func @transform_4(%arg0: i32) -> (i32, i32) {
    %c0_i32 = arith.constant 0 : i32
    %c0_i32_0 = arith.constant 0 : i32
    %c0_i32_1 = arith.constant 0 : i32
    return %c0_i32, %c0_i32_0 : i32, i32
  }
  func.func @transform_5(%arg0: i32) -> (i32, i32) {
    %c0_i32 = arith.constant 0 : i32
    %c0_i32_0 = arith.constant 0 : i32
    %c0_i32_1 = arith.constant 0 : i32
    return %c0_i32, %c0_i32_0 : i32, i32
  }
  func.func @transform_6(%arg0: i32) -> (i32, i32, i32) {
    %c0_i32 = arith.constant 0 : i32
    %c0_i32_0 = arith.constant 0 : i32
    %c0_i32_1 = arith.constant 0 : i32
    %c0_i32_2 = arith.constant 0 : i32
    return %c0_i32, %c0_i32_0, %c0_i32_1 : i32, i32, i32
  }
}

</mosaic_0001>

<llo_original>
// kernel: tpu_custom_call.1
$region0: #{tpu_custom_call.1}
  #allocation0 [shape = 'u32[]', space=smem, size = 0x4, offset = 0x4, fixed_abs, tag = 'smem constant byte address 0x4 - core index']
  #allocation1 [shape = 'u32[144,128]{1,0:T(1,128)}', space=vmem, size = 0x12000, scoped, tag = 'internal scratch']
  #allocation2 [shape = 'bf16[144,768]{1,0:T(8,128)(2,1)}', space=vmem, size = 0x36000, scoped, tag = 'scratch operand']
  #allocation3 [shape = 'f32[8,1]{1,0:T(8,128)}', space=vmem, size = 0x1000, scoped, tag = 'scratch operand']
  #allocation4 [shape = 'f32[8,1]{1,0:T(8,128)}', space=vmem, size = 0x1000, scoped, tag = 'scratch operand']
  %s0 = inlined_call_operand.hbm [shape: bf16[2,16,512], index: 0, kind: input, shape index: {}]
  %s1 = inlined_call_operand.vmem [shape: bf16[8,144], index: 1, kind: input, shape index: {}]
  %s2 = inlined_call_operand.vmem [shape: f32[8,1], index: 2, kind: input, shape index: {}]
  %s3 = inlined_call_operand.vmem [shape: f32[8,1], index: 3, kind: input, shape index: {}]
  %s4 = inlined_call_operand.vmem [shape: f32[8,1], index: 4, kind: input, shape index: {}]
  %s5 = inlined_call_operand.vmem [shape: f32[1,768], index: 5, kind: input, shape index: {}]
  %s6 = inlined_call_operand.hbm [shape: f32[2,8,384], index: 6, kind: output, shape index: {}]
  %s7 = sld [smem:[#allocation0]]
  $region46: #{tpu_custom_call.1} parent=0
    _
  %s9 = ssub.s32 1, %s7
  %s10 = scalar_select 0, %s9, %s7
  $region1: #{tpu_custom_call.1} parent=0
    #allocation5 [shape = 'u8[32768]{0}', space=vmem, size = 0x8000, scoped, tag = 'input window, operand 0, single buffered']
    #allocation6 [shape = 's32[1]{0}', space=sflag, size = 0x4, scoped, tag = 'scoped memory for tpu_custom_call.1']
    #allocation7 [shape = 's32[1]{0}', space=sflag, size = 0x4, scoped, tag = 'scoped memory for tpu_custom_call.1']
    #allocation8 [shape = 'u8[24576]{0}', space=vmem, size = 0x6000, scoped, tag = 'output window, operand 0, single buffered']
    %11 = vsyncpa [#allocation6], 0
    %12 = vsyncpa [#allocation7], 0
    // Predicated region
    $region2: #{tpu_custom_call.1} parent=1 // pred_check
      _
    $region3: #{tpu_custom_call.1} parent=1 // pred_check_branch
      %14 = sbr.rel (0) target = $region5
    $region4: #{tpu_custom_call.1} parent=1 // pred_region
      %s16 = ssub.s32 1024, 1024
      %17 = vsyncadd [#allocation6], %s16
      %s18 = sshll.u32 [#allocation5], 4
      %s19 = int_to_ptr.vmem [resolvable:$true] %s18
      %24 = dma.hbm_to_vmem [thread:$0]  %s0, 1024, %s19, [#allocation6], 256, 256, 16
    $region5: #{tpu_custom_call.1} parent=1 // pred_fallthru
      _
    // Predicated region
    $region6: #{tpu_custom_call.1} parent=1 // pred_check
      _
    $region7: #{tpu_custom_call.1} parent=1 // pred_check_branch
      %26 = sbr.rel (0) target = $region9
    $region8: #{tpu_custom_call.1} parent=1 // pred_region
      _
    $region9: #{tpu_custom_call.1} parent=1 // pred_fallthru
      _
    // Predicated region
    $region10: #{tpu_custom_call.1} parent=1 // pred_check
      _
    $region11: #{tpu_custom_call.1} parent=1 // pred_check_branch
      %28 = sbr.rel (0) target = $region13
    $region12: #{tpu_custom_call.1} parent=1 // pred_region
      _
    $region13: #{tpu_custom_call.1} parent=1 // pred_fallthru
      _
    // Predicated region
    $region14: #{tpu_custom_call.1} parent=1 // pred_check
      _
    $region15: #{tpu_custom_call.1} parent=1 // pred_check_branch
      %30 = sbr.rel (0) target = $region17
    $region16: #{tpu_custom_call.1} parent=1 // pred_region
      _
    $region17: #{tpu_custom_call.1} parent=1 // pred_fallthru
      _
    // Predicated region
    $region18: #{tpu_custom_call.1} parent=1 // pred_check
      _
    $region19: #{tpu_custom_call.1} parent=1 // pred_check_branch
      %32 = sbr.rel (0) target = $region21
    $region20: #{tpu_custom_call.1} parent=1 // pred_region
      _
    $region21: #{tpu_custom_call.1} parent=1 // pred_fallthru
      _
    // Predicated region
    $region22: #{tpu_custom_call.1} parent=1 // pred_check
      _
    $region23: #{tpu_custom_call.1} parent=1 // pred_check_branch
      %34 = sbr.rel (0) target = $region25
    $region24: #{tpu_custom_call.1} parent=1 // pred_region
      _
    $region25: #{tpu_custom_call.1} parent=1 // pred_fallthru
      _
    // Predicated region
    $region26: #{tpu_custom_call.1} parent=1 // pred_check
      _
    $region27: #{tpu_custom_call.1} parent=1 // pred_check_branch
      %36 = sbr.rel (0) target = $region29
    $region28: #{tpu_custom_call.1} parent=1 // pred_region
      %37 = dma.done [#allocation6], 1024
    $region29: #{tpu_custom_call.1} parent=1 // pred_fallthru
      _
    %p39 = scmp.eq.s32.totalorder 0, 0
    // Predicated region
    $region30: #{tpu_custom_call.1} parent=1 // pred_check
      %p40 = pneg %p39
    $region31: #{tpu_custom_call.1} parent=1 // pred_check_branch
      %42 = sbr.rel (%p40) target = $region33
    $region32: #{tpu_custom_call.1} parent=1 // pred_region
      %vm43 = vcmask 7168
      %44 = vst.msk [vmem:[#allocation3] sm:$0xff] %vm43, 0.0
      %45 = vst.msk [vmem:[#allocation4] sm:$0xff] %vm43, 0.0
    $region33: #{tpu_custom_call.1} parent=1 // pred_fallthru
      _
    %v46 = vld [vmem:[#allocation5] sm:$0xff]
    %v47 = vld [vmem:[#allocation5 + $0x8] sm:$0xf]
    %v48 = vld [vmem:[#allocation5 + $0x10] sm:$0xff]
    %v49 = vld [vmem:[#allocation5 + $0x18] sm:$0xf]
    %50 = vst [vmem:[#allocation2] sm:$0xff] %v46
    %51 = vst [vmem:[#allocation2 + $0x8] sm:$0xf] %v47
    %52 = vst [vmem:[#allocation2 + $0x18] sm:$0xff] %v48
    %53 = vst [vmem:[#allocation2 + $0x20] sm:$0xf] %v49
    %v54 = vld [vmem:[#allocation5] sm:$0xff]
    %v55 = vld [vmem:[#allocation5 + $0x8] sm:$0xff]
    %v56 = vld [vmem:[#allocation5 + $0x10] sm:$0xff]
    %v57 = vld [vmem:[#allocation5 + $0x18] sm:$0xff]
    %62 = vrot.lane.b32.xlu0 %v54, 127
    %v63 = vpop.permute.xlu0 %62
    %64 = vrot.lane.b32.xlu0 %v55, 127
    %v65 = vpop.permute.xlu0 %64
    %66 = vrot.lane.b32.xlu0 %v56, 127
    %v67 = vpop.permute.xlu0 %66
    %68 = vrot.lane.b32.xlu0 %v57, 127
    %v69 = vpop.permute.xlu0 %68
    %v70 = vrot.slane %v63, 4
    %v71 = vrot.slane %v65, 4
    %v72 = vrot.slane %v67, 4
    %v73 = vrot.slane %v69, 4
    %vm74 = vcmask 1043456
    %v75 = vsel %vm74, %v70, %v71
    %vm76 = vcmask 1039360
    %v77 = vsel %vm76, %v63, %v75
    %v78 = vsel %vm76, %v65, %v71
    %v79 = vsel %vm74, %v72, %v73
    %v80 = vsel %vm76, %v67, %v79
    %v81 = vsel %vm76, %v69, %v73
    %86 = vst [vmem:[#allocation2 + $0x30] sm:$0xff] %v77
    %87 = vst [vmem:[#allocation2 + $0x38] sm:$0xf] %v78
    %88 = vst [vmem:[#allocation2 + $0x48] sm:$0xff] %v80
    %89 = vst [vmem:[#allocation2 + $0x50] sm:$0xf] %v81
    %v90 = vld [vmem:[#allocation5] sm:$0xff]
    %v91 = vld [vmem:[#allocation5 + $0x8] sm:$0xff]
    %v92 = vld [vmem:[#allocation5 + $0x10] sm:$0xff]
    %v93 = vld [vmem:[#allocation5 + $0x18] sm:$0xff]
    %98 = vrot.lane.b32.xlu0 %v90, 126
    %v99 = vpop.permute.xlu0 %98
    %100 = vrot.lane.b32.xlu0 %v91, 126
    %v101 = vpop.permute.xlu0 %100
    %102 = vrot.lane.b32.xlu0 %v92, 126
    %v103 = vpop.permute.xlu0 %102
    %104 = vrot.lane.b32.xlu0 %v93, 126
    %v105 = vpop.permute.xlu0 %104
    %v106 = vrot.slane %v99, 4
    %v107 = vrot.slane %v101, 4
    %v108 = vrot.slane %v103, 4
    %v109 = vrot.slane %v105, 4
    %v110 = vsel %vm74, %v106, %v107
    %vm111 = vcmask 1031168
    %v112 = vsel %vm111, %v99, %v110
    %v113 = vsel %vm111, %v101, %v107
    %v114 = vsel %vm74, %v108, %v109
    %v115 = vsel %vm111, %v103, %v114
    %v116 = vsel %vm111, %v105, %v109
    %121 = vst [vmem:[#allocation2 + $0x60] sm:$0xff] %v112
    %122 = vst [vmem:[#allocation2 + $0x68] sm:$0xf] %v113
    %123 = vst [vmem:[#allocation2 + $0x78] sm:$0xff] %v115
    %124 = vst [vmem:[#allocation2 + $0x80] sm:$0xf] %v116
    %v125 = vld [vmem:[#allocation5] sm:$0xff]
    %v126 = vld [vmem:[#allocation5 + $0x8] sm:$0xff]
    %v127 = vld [vmem:[#allocation5 + $0x10] sm:$0xff]
    %v128 = vld [vmem:[#allocation5 + $0x18] sm:$0xff]
    %133 = vrot.lane.b32.xlu0 %v125, 110
    %v134 = vpop.permute.xlu0 %133
    %135 = vrot.lane.b32.xlu0 %v126, 110
    %v136 = vpop.permute.xlu0 %135
    %137 = vrot.lane.b32.xlu0 %v127, 110
    %v138 = vpop.permute.xlu0 %137
    %139 = vrot.lane.b32.xlu0 %v128, 110
    %v140 = vpop.permute.xlu0 %139
    %v141 = vrot.slane %v134, 4
    %v142 = vrot.slane %v136, 4
    %v143 = vrot.slane %v138, 4
    %v144 = vrot.slane %v140, 4
    %v145 = vsel %vm74, %v141, %v142
    %vm146 = vcmask 900096
    %v147 = vsel %vm146, %v134, %v145
    %v148 = vsel %vm146, %v136, %v142
    %v149 = vsel %vm74, %v143, %v144
    %v150 = vsel %vm146, %v138, %v149
    %v151 = vsel %vm146, %v140, %v144
    %156 = vst [vmem:[#allocation2 + $0x90] sm:$0xff] %v147
    %157 = vst [vmem:[#allocation2 + $0x98] sm:$0xf] %v148
    %158 = vst [vmem:[#allocation2 + $0xa8] sm:$0xff] %v150
    %159 = vst [vmem:[#allocation2 + $0xb0] sm:$0xf] %v151
    %v160 = vld [vmem:[#allocation5] sm:$0xff]
    %v161 = vld [vmem:[#allocation5 + $0x8] sm:$0xff]
    %v162 = vld [vmem:[#allocation5 + $0x10] sm:$0xff]
    %v163 = vld [vmem:[#allocation5 + $0x18] sm:$0xff]
    %168 = vrot.lane.b32.xlu0 %v160, 109
    %v169 = vpop.permute.xlu0 %168
    %170 = vrot.lane.b32.xlu0 %v161, 109
    %v171 = vpop.permute.xlu0 %170
    %172 = vrot.lane.b32.xlu0 %v162, 109
    %v173 = vpop.permute.xlu0 %172
    %174 = vrot.lane.b32.xlu0 %v163, 109
    %v175 = vpop.permute.xlu0 %174
    %v176 = vrot.slane %v169, 4
    %v177 = vrot.slane %v171, 4
    %v178 = vrot.slane %v173, 4
    %v179 = vrot.slane %v175, 4
    %v180 = vsel %vm74, %v176, %v177
    %vm181 = vcmask 891904
    %v182 = vsel %vm181, %v169, %v180
    %v183 = vsel %vm181, %v171, %v177
    %v184 = vsel %vm74, %v178, %v179
    %v185 = vsel %vm181, %v173, %v184
    %v186 = vsel %vm181, %v175, %v179
    %191 = vst [vmem:[#allocation2 + $0xc0] sm:$0xff] %v182
    %192 = vst [vmem:[#allocation2 + $0xc8] sm:$0xf] %v183
    %193 = vst [vmem:[#allocation2 + $0xd8] sm:$0xff] %v185
    %194 = vst [vmem:[#allocation2 + $0xe0] sm:$0xf] %v186
    %v195 = vld [vmem:[#allocation5] sm:$0xff]
    %v196 = vld [vmem:[#allocation5 + $0x8] sm:$0xff]
    %v197 = vld [vmem:[#allocation5 + $0x10] sm:$0xff]
    %v198 = vld [vmem:[#allocation5 + $0x18] sm:$0xff]
    %203 = vrot.lane.b32.xlu0 %v195, 108
    %v204 = vpop.permute.xlu0 %203
    %205 = vrot.lane.b32.xlu0 %v196, 108
    %v206 = vpop.permute.xlu0 %205
    %207 = vrot.lane.b32.xlu0 %v197, 108
    %v208 = vpop.permute.xlu0 %207
    %209 = vrot.lane.b32.xlu0 %v198, 108
    %v210 = vpop.permute.xlu0 %209
    %v211 = vrot.slane %v204, 4
    %v212 = vrot.slane %v206, 4
    %v213 = vrot.slane %v208, 4
    %v214 = vrot.slane %v210, 4
    %v215 = vsel %vm74, %v211, %v212
    %vm216 = vcmask 883712
    %v217 = vsel %vm216, %v204, %v215
    %v218 = vsel %vm216, %v206, %v212
    %v219 = vsel %vm74, %v213, %v214
    %v220 = vsel %vm216, %v208, %v219
    %v221 = vsel %vm216, %v210, %v214
    %226 = vst [vmem:[#allocation2 + $0xf0] sm:$0xff] %v217
    %227 = vst [vmem:[#allocation2 + $0xf8] sm:$0xf] %v218
    %228 = vst [vmem:[#allocation2 + $0x108] sm:$0xff] %v220
    %229 = vst [vmem:[#allocation2 + $0x110] sm:$0xf] %v221
    %v230 = vld [vmem:[#allocation5] sm:$0xff]
    %v231 = vld [vmem:[#allocation5 + $0x8] sm:$0xff]
    %v232 = vld [vmem:[#allocation5 + $0x10] sm:$0xff]
    %v233 = vld [vmem:[#allocation5 + $0x18] sm:$0xff]
    %238 = vrot.lane.b32.xlu0 %v230, 92
    %v239 = vpop.permute.xlu0 %238
    %240 = vrot.lane.b32.xlu0 %v231, 92
    %v241 = vpop.permute.xlu0 %240
    %242 = vrot.lane.b32.xlu0 %v232, 92
    %v243 = vpop.permute.xlu0 %242
    %244 = vrot.lane.b32.xlu0 %v233, 92
    %v245 = vpop.permute.xlu0 %244
    %v246 = vrot.slane %v239, 4
    %v247 = vrot.slane %v241, 4
    %v248 = vrot.slane %v243, 4
    %v249 = vrot.slane %v245, 4
    %v250 = vsel %vm74, %v246, %v247
    %vm251 = vcmask 752640
    %v252 = vsel %vm251, %v239, %v250
    %v253 = vsel %vm251, %v241, %v247
    %v254 = vsel %vm74, %v248, %v249
    %v255 = vsel %vm251, %v243, %v254
    %v256 = vsel %vm251, %v245, %v249
    %261 = vst [vmem:[#allocation2 + $0x120] sm:$0xff] %v252
    %262 = vst [vmem:[#allocation2 + $0x128] sm:$0xf] %v253
    %263 = vst [vmem:[#allocation2 + $0x138] sm:$0xff] %v255
    %264 = vst [vmem:[#allocation2 + $0x140] sm:$0xf] %v256
    %v265 = vld [vmem:[#allocation5] sm:$0xff]
    %v266 = vld [vmem:[#allocation5 + $0x8] sm:$0xff]
    %v267 = vld [vmem:[#allocation5 + $0x10] sm:$0xff]
    %v268 = vld [vmem:[#allocation5 + $0x18] sm:$0xff]
    %273 = vrot.lane.b32.xlu0 %v265, 91
    %v274 = vpop.permute.xlu0 %273
    %275 = vrot.lane.b32.xlu0 %v266, 91
    %v276 = vpop.permute.xlu0 %275
    %277 = vrot.lane.b32.xlu0 %v267, 91
    %v278 = vpop.permute.xlu0 %277
    %279 = vrot.lane.b32.xlu0 %v268, 91
    %v280 = vpop.permute.xlu0 %279
    %v281 = vrot.slane %v274, 4
    %v282 = vrot.slane %v276, 4
    %v283 = vrot.slane %v278, 4
    %v284 = vrot.slane %v280, 4
    %v285 = vsel %vm74, %v281, %v282
    %vm286 = vcmask 744448
    %v287 = vsel %vm286, %v274, %v285
    %v288 = vsel %vm286, %v276, %v282
    %v289 = vsel %vm74, %v283, %v284
    %v290 = vsel %vm286, %v278, %v289
    %v291 = vsel %vm286, %v280, %v284
    %296 = vst [vmem:[#allocation2 + $0x150] sm:$0xff] %v287
    %297 = vst [vmem:[#allocation2 + $0x158] sm:$0xf] %v288
    %298 = vst [vmem:[#allocation2 + $0x168] sm:$0xff] %v290
    %299 = vst [vmem:[#allocation2 + $0x170] sm:$0xf] %v291
    %v300 = vld [vmem:[#allocation5] sm:$0xff]
    %v301 = vld [vmem:[#allocation5 + $0x8] sm:$0xff]
    %v302 = vld [vmem:[#allocation5 + $0x10] sm:$0xff]
    %v303 = vld [vmem:[#allocation5 + $0x18] sm:$0xff]
    %308 = vrot.lane.b32.xlu0 %v300, 90
    %v309 = vpop.permute.xlu0 %308
    %310 = vrot.lane.b32.xlu0 %v301, 90
    %v311 = vpop.permute.xlu0 %310
    %312 = vrot.lane.b32.xlu0 %v302, 90
    %v313 = vpop.permute.xlu0 %312
    %314 = vrot.lane.b32.xlu0 %v303, 90
    %v315 = vpop.permute.xlu0 %314
    %v316 = vrot.slane %v309, 4
    %v317 = vrot.slane %v311, 4
    %v318 = vrot.slane %v313, 4
    %v319 = vrot.slane %v315, 4
    %v320 = vsel %vm74, %v316, %v317
    %vm321 = vcmask 736256
    %v322 = vsel %vm321, %v309, %v320
    %v323 = vsel %vm321, %v311, %v317
    %v324 = vsel %vm74, %v318, %v319
    %v325 = vsel %vm321, %v313, %v324
    %v326 = vsel %vm321, %v315, %v319
    %331 = vst [vmem:[#allocation2 + $0x180] sm:$0xff] %v322
    %332 = vst [vmem:[#allocation2 + $0x188] sm:$0xf] %v323
    %333 = vst [vmem:[#allocation2 + $0x198] sm:$0xff] %v325
    %334 = vst [vmem:[#allocation2 + $0x1a0] sm:$0xf] %v326
    %s335 = scalar_lea.vmem [#allocation5], 32
    %v336 = vld [vmem:[%s335] sm:$0xff]
    %v337 = vld [vmem:[%s335 + $0x8] sm:$0xf]
    %v338 = vld [vmem:[%s335 + $0x10] sm:$0xff]
    %v339 = vld [vmem:[%s335 + $0x18] sm:$0xf]
    %340 = vst [vmem:[#allocation2 + $0xc] sm:$0xff] %v336
    %341 = vst [vmem:[#allocation2 + $0x14] sm:$0xf] %v337
    %342 = vst [vmem:[#allocation2 + $0x24] sm:$0xff] %v338
    %343 = vst [vmem:[#allocation2 + $0x2c] sm:$0xf] %v339
    %v344 = vld [vmem:[%s335] sm:$0xff]
    %v345 = vld [vmem:[%s335 + $0x8] sm:$0xff]
    %v346 = vld [vmem:[%s335 + $0x10] sm:$0xff]
    %v347 = vld [vmem:[%s335 + $0x18] sm:$0xff]
    %352 = vrot.lane.b32.xlu0 %v344, 127
    %v353 = vpop.permute.xlu0 %352
    %354 = vrot.lane.b32.xlu0 %v345, 127
    %v355 = vpop.permute.xlu0 %354
    %356 = vrot.lane.b32.xlu0 %v346, 127
    %v357 = vpop.permute.xlu0 %356
    %358 = vrot.lane.b32.xlu0 %v347, 127
    %v359 = vpop.permute.xlu0 %358
    %v360 = vrot.slane %v353, 4
    %v361 = vrot.slane %v355, 4
    %v362 = vrot.slane %v357, 4
    %v363 = vrot.slane %v359, 4
    %v364 = vsel %vm74, %v360, %v361
    %v365 = vsel %vm76, %v353, %v364
    %v366 = vsel %vm76, %v355, %v361
    %v367 = vsel %vm74, %v362, %v363
    %v368 = vsel %vm76, %v357, %v367
    %v369 = vsel %vm76, %v359, %v363
    %374 = vst [vmem:[#allocation2 + $0x3c] sm:$0xff] %v365
    %375 = vst [vmem:[#allocation2 + $0x44] sm:$0xf] %v366
    %376 = vst [vmem:[#allocation2 + $0x54] sm:$0xff] %v368
    %377 = vst [vmem:[#allocation2 + $0x5c] sm:$0xf] %v369
    %v378 = vld [vmem:[%s335] sm:$0xff]
    %v379 = vld [vmem:[%s335 + $0x8] sm:$0xff]
    %v380 = vld [vmem:[%s335 + $0x10] sm:$0xff]
    %v381 = vld [vmem:[%s335 + $0x18] sm:$0xff]
    %386 = vrot.lane.b32.xlu0 %v378, 126
    %v387 = vpop.permute.xlu0 %386
    %388 = vrot.lane.b32.xlu0 %v379, 126
    %v389 = vpop.permute.xlu0 %388
    %390 = vrot.lane.b32.xlu0 %v380, 126
    %v391 = vpop.permute.xlu0 %390
    %392 = vrot.lane.b32.xlu0 %v381, 126
    %v393 = vpop.permute.xlu0 %392
    %v394 = vrot.slane %v387, 4
    %v395 = vrot.slane %v389, 4
    %v396 = vrot.slane %v391, 4
    %v397 = vrot.slane %v393, 4
    %v398 = vsel %vm74, %v394, %v395
    %v399 = vsel %vm111, %v387, %v398
    %v400 = vsel %vm111, %v389, %v395
    %v401 = vsel %vm74, %v396, %v397
    %v402 = vsel %vm111, %v391, %v401
    %v403 = vsel %vm111, %v393, %v397
    %408 = vst [vmem:[#allocation2 + $0x6c] sm:$0xff] %v399
    %409 = vst [vmem:[#allocation2 + $0x74] sm:$0xf] %v400
    %410 = vst [vmem:[#allocation2 + $0x84] sm:$0xff] %v402
    %411 = vst [vmem:[#allocation2 + $0x8c] sm:$0xf] %v403
    %v412 = vld [vmem:[%s335] sm:$0xff]
    %v413 = vld [vmem:[%s335 + $0x8] sm:$0xff]
    %v414 = vld [vmem:[%s335 + $0x10] sm:$0xff]
    %v415 = vld [vmem:[%s335 + $0x18] sm:$0xff]
    %420 = vrot.lane.b32.xlu0 %v412, 110
    %v421 = vpop.permute.xlu0 %420
    %422 = vrot.lane.b32.xlu0 %v413, 110
    %v423 = vpop.permute.xlu0 %422
    %424 = vrot.lane.b32.xlu0 %v414, 110
    %v425 = vpop.permute.xlu0 %424
    %426 = vrot.lane.b32.xlu0 %v415, 110
    %v427 = vpop.permute.xlu0 %426
    %v428 = vrot.slane %v421, 4
    %v429 = vrot.slane %v423, 4
    %v430 = vrot.slane %v425, 4
    %v431 = vrot.slane %v427, 4
    %v432 = vsel %vm74, %v428, %v429
    %v433 = vsel %vm146, %v421, %v432
    %v434 = vsel %vm146, %v423, %v429
    %v435 = vsel %vm74, %v430, %v431
    %v436 = vsel %vm146, %v425, %v435
    %v437 = vsel %vm146, %v427, %v431
    %442 = vst [vmem:[#allocation2 + $0x9c] sm:$0xff] %v433
    %443 = vst [vmem:[#allocation2 + $0xa4] sm:$0xf] %v434
    %444 = vst [vmem:[#allocation2 + $0xb4] sm:$0xff] %v436
    %445 = vst [vmem:[#allocation2 + $0xbc] sm:$0xf] %v437
    %v446 = vld [vmem:[%s335] sm:$0xff]
    %v447 = vld [vmem:[%s335 + $0x8] sm:$0xff]
    %v448 = vld [vmem:[%s335 + $0x10] sm:$0xff]
    %v449 = vld [vmem:[%s335 + $0x18] sm:$0xff]
    %454 = vrot.lane.b32.xlu0 %v446, 109
    %v455 = vpop.permute.xlu0 %454
    %456 = vrot.lane.b32.xlu0 %v447, 109
    %v457 = vpop.permute.xlu0 %456
    %458 = vrot.lane.b32.xlu0 %v448, 109
    %v459 = vpop.permute.xlu0 %458
    %460 = vrot.lane.b32.xlu0 %v449, 109
    %v461 = vpop.permute.xlu0 %460
    %v462 = vrot.slane %v455, 4
    %v463 = vrot.slane %v457, 4
    %v464 = vrot.slane %v459, 4
    %v465 = vrot.slane %v461, 4
    %v466 = vsel %vm74, %v462, %v463
    %v467 = vsel %vm181, %v455, %v466
    %v468 = vsel %vm181, %v457, %v463
    %v469 = vsel %vm74, %v464, %v465
    %v470 = vsel %vm181, %v459, %v469
    %v471 = vsel %vm181, %v461, %v465
    %476 = vst [vmem:[#allocation2 + $0xcc] sm:$0xff] %v467
    %477 = vst [vmem:[#allocation2 + $0xd4] sm:$0xf] %v468
    %478 = vst [vmem:[#allocation2 + $0xe4] sm:$0xff] %v470
    %479 = vst [vmem:[#allocation2 + $0xec] sm:$0xf] %v471
    %v480 = vld [vmem:[%s335] sm:$0xff]
    %v481 = vld [vmem:[%s335 + $0x8] sm:$0xff]
    %v482 = vld [vmem:[%s335 + $0x10] sm:$0xff]
    %v483 = vld [vmem:[%s335 + $0x18] sm:$0xff]
    %488 = vrot.lane.b32.xlu0 %v480, 108
    %v489 = vpop.permute.xlu0 %488
    %490 = vrot.lane.b32.xlu0 %v481, 108
    %v491 = vpop.permute.xlu0 %490
    %492 = vrot.lane.b32.xlu0 %v482, 108
    %v493 = vpop.permute.xlu0 %492
    %494 = vrot.lane.b32.xlu0 %v483, 108
    %v495 = vpop.permute.xlu0 %494
    %v496 = vrot.slane %v489, 4
    %v497 = vrot.slane %v491, 4
    %v498 = vrot.slane %v493, 4
    %v499 = vrot.slane %v495, 4
    %v500 = vsel %vm74, %v496, %v497
    %v501 = vsel %vm216, %v489, %v500
    %v502 = vsel %vm216, %v491, %v497
    %v503 = vsel %vm74, %v498, %v499
    %v504 = vsel %vm216, %v493, %v503
    %v505 = vsel %vm216, %v495, %v499
    %510 = vst [vmem:[#allocation2 + $0xfc] sm:$0xff] %v501
    %511 = vst [vmem:[#allocation2 + $0x104] sm:$0xf] %v502
    %512 = vst [vmem:[#allocation2 + $0x114] sm:$0xff] %v504
    %513 = vst [vmem:[#allocation2 + $0x11c] sm:$0xf] %v505
    %v514 = vld [vmem:[%s335] sm:$0xff]
    %v515 = vld [vmem:[%s335 + $0x8] sm:$0xff]
    %v516 = vld [vmem:[%s335 + $0x10] sm:$0xff]
    %v517 = vld [vmem:[%s335 + $0x18] sm:$0xff]
    %522 = vrot.lane.b32.xlu0 %v514, 92
    %v523 = vpop.permute.xlu0 %522
    %524 = vrot.lane.b32.xlu0 %v515, 92
    %v525 = vpop.permute.xlu0 %524
    %526 = vrot.lane.b32.xlu0 %v516, 92
    %v527 = vpop.permute.xlu0 %526
    %528 = vrot.lane.b32.xlu0 %v517, 92
    %v529 = vpop.permute.xlu0 %528
    %v530 = vrot.slane %v523, 4
    %v531 = vrot.slane %v525, 4
    %v532 = vrot.slane %v527, 4
    %v533 = vrot.slane %v529, 4
    %v534 = vsel %vm74, %v530, %v531
    %v535 = vsel %vm251, %v523, %v534
    %v536 = vsel %vm251, %v525, %v531
    %v537 = vsel %vm74, %v532, %v533
    %v538 = vsel %vm251, %v527, %v537
    %v539 = vsel %vm251, %v529, %v533
    %544 = vst [vmem:[#allocation2 + $0x12c] sm:$0xff] %v535
    %545 = vst [vmem:[#allocation2 + $0x134] sm:$0xf] %v536
    %546 = vst [vmem:[#allocation2 + $0x144] sm:$0xff] %v538
    %547 = vst [vmem:[#allocation2 + $0x14c] sm:$0xf] %v539
    %v548 = vld [vmem:[%s335] sm:$0xff]
    %v549 = vld [vmem:[%s335 + $0x8] sm:$0xff]
    %v550 = vld [vmem:[%s335 + $0x10] sm:$0xff]
    %v551 = vld [vmem:[%s335 + $0x18] sm:$0xff]
    %556 = vrot.lane.b32.xlu0 %v548, 91
    %v557 = vpop.permute.xlu0 %556
    %558 = vrot.lane.b32.xlu0 %v549, 91
    %v559 = vpop.permute.xlu0 %558
    %560 = vrot.lane.b32.xlu0 %v550, 91
    %v561 = vpop.permute.xlu0 %560
    %562 = vrot.lane.b32.xlu0 %v551, 91
    %v563 = vpop.permute.xlu0 %562
    %v564 = vrot.slane %v557, 4
    %v565 = vrot.slane %v559, 4
    %v566 = vrot.slane %v561, 4
    %v567 = vrot.slane %v563, 4
    %v568 = vsel %vm74, %v564, %v565
    %v569 = vsel %vm286, %v557, %v568
    %v570 = vsel %vm286, %v559, %v565
    %v571 = vsel %vm74, %v566, %v567
    %v572 = vsel %vm286, %v561, %v571
    %v573 = vsel %vm286, %v563, %v567
    %578 = vst [vmem:[#allocation2 + $0x15c] sm:$0xff] %v569
    %579 = vst [vmem:[#allocation2 + $0x164] sm:$0xf] %v570
    %580 = vst [vmem:[#allocation2 + $0x174] sm:$0xff] %v572
    %581 = vst [vmem:[#allocation2 + $0x17c] sm:$0xf] %v573
    %v582 = vld [vmem:[%s335] sm:$0xff]
    %v583 = vld [vmem:[%s335 + $0x8] sm:$0xff]
    %v584 = vld [vmem:[%s335 + $0x10] sm:$0xff]
    %v585 = vld [vmem:[%s335 + $0x18] sm:$0xff]
    %590 = vrot.lane.b32.xlu0 %v582, 90
    %v591 = vpop.permute.xlu0 %590
    %592 = vrot.lane.b32.xlu0 %v583, 90
    %v593 = vpop.permute.xlu0 %592
    %594 = vrot.lane.b32.xlu0 %v584, 90
    %v595 = vpop.permute.xlu0 %594
    %596 = vrot.lane.b32.xlu0 %v585, 90
    %v597 = vpop.permute.xlu0 %596
    %v598 = vrot.slane %v591, 4
    %v599 = vrot.slane %v593, 4
    %v600 = vrot.slane %v595, 4
    %v601 = vrot.slane %v597, 4
    %v602 = vsel %vm74, %v598, %v599
    %v603 = vsel %vm321, %v591, %v602
    %v604 = vsel %vm321, %v593, %v599
    %v605 = vsel %vm74, %v600, %v601
    %v606 = vsel %vm321, %v595, %v605
    %v607 = vsel %vm321, %v597, %v601
    %612 = vst [vmem:[#allocation2 + $0x18c] sm:$0xff] %v603
    %613 = vst [vmem:[#allocation2 + $0x194] sm:$0xf] %v604
    %614 = vst [vmem:[#allocation2 + $0x1a4] sm:$0xff] %v606
    %615 = vst [vmem:[#allocation2 + $0x1ac] sm:$0xf] %v607
    %v616 = vld [vmem:[%s1] sm:$0xff]
    %v617 = vld [vmem:[#allocation2] sm:$0xff]
    %v618 = vld [vmem:[#allocation2 + $0x8] sm:$0xff]
    %v619 = vld [vmem:[#allocation2 + $0x10] sm:$0xff]
    %v620 = vld [vmem:[#allocation2 + $0x18] sm:$0xff]
    %v621 = vld [vmem:[#allocation2 + $0x20] sm:$0xff]
    %v622 = vld [vmem:[#allocation2 + $0x28] sm:$0xff]
    %v623 = vld [vmem:[#allocation2 + $0x30] sm:$0xff]
    %v624 = vld [vmem:[#allocation2 + $0x38] sm:$0xff]
    %v625 = vld [vmem:[#allocation2 + $0x40] sm:$0xff]
    %v626 = vld [vmem:[#allocation2 + $0x48] sm:$0xff]
    %v627 = vld [vmem:[#allocation2 + $0x50] sm:$0xff]
    %v628 = vld [vmem:[#allocation2 + $0x58] sm:$0xff]
    %v629 = vld [vmem:[#allocation2 + $0x60] sm:$0xff]
    %v630 = vld [vmem:[#allocation2 + $0x68] sm:$0xff]
    %v631 = vld [vmem:[#allocation2 + $0x70] sm:$0xff]
    %v632 = vld [vmem:[#allocation2 + $0x78] sm:$0xff]
    %v633 = vld [vmem:[#allocation2 + $0x80] sm:$0xff]
    %v634 = vld [vmem:[#allocation2 + $0x88] sm:$0xff]
    %v635 = vld [vmem:[#allocation2 + $0x90] sm:$0xff]
    %v636 = vld [vmem:[#allocation2 + $0x98] sm:$0xff]
    %v637 = vld [vmem:[#allocation2 + $0xa0] sm:$0xff]
    %v638 = vld [vmem:[#allocation2 + $0xa8] sm:$0xff]
    %v639 = vld [vmem:[#allocation2 + $0xb0] sm:$0xff]
    %v640 = vld [vmem:[#allocation2 + $0xb8] sm:$0xff]
    %v641 = vld [vmem:[#allocation2 + $0xc0] sm:$0xff]
    %v642 = vld [vmem:[#allocation2 + $0xc8] sm:$0xff]
    %v643 = vld [vmem:[#allocation2 + $0xd0] sm:$0xff]
    %v644 = vld [vmem:[#allocation2 + $0xd8] sm:$0xff]
    %v645 = vld [vmem:[#allocation2 + $0xe0] sm:$0xff]
    %v646 = vld [vmem:[#allocation2 + $0xe8] sm:$0xff]
    %v647 = vld [vmem:[#allocation2 + $0xf0] sm:$0xff]
    %v648 = vld [vmem:[#allocation2 + $0xf8] sm:$0xff]
    %v649 = vld [vmem:[#allocation2 + $0x100] sm:$0xff]
    %v650 = vld [vmem:[#allocation2 + $0x108] sm:$0xff]
    %v651 = vld [vmem:[#allocation2 + $0x110] sm:$0xff]
    %v652 = vld [vmem:[#allocation2 + $0x118] sm:$0xff]
    %v653 = vld [vmem:[#allocation2 + $0x120] sm:$0xff]
    %v654 = vld [vmem:[#allocation2 + $0x128] sm:$0xff]
    %v655 = vld [vmem:[#allocation2 + $0x130] sm:$0xff]
    %v656 = vld [vmem:[#allocation2 + $0x138] sm:$0xff]
    %v657 = vld [vmem:[#allocation2 + $0x140] sm:$0xff]
    %v658 = vld [vmem:[#allocation2 + $0x148] sm:$0xff]
    %v659 = vld [vmem:[#allocation2 + $0x150] sm:$0xff]
    %v660 = vld [vmem:[#allocation2 + $0x158] sm:$0xff]
    %v661 = vld [vmem:[#allocation2 + $0x160] sm:$0xff]
    %v662 = vld [vmem:[#allocation2 + $0x168] sm:$0xff]
    %v663 = vld [vmem:[#allocation2 + $0x170] sm:$0xff]
    %v664 = vld [vmem:[#allocation2 + $0x178] sm:$0xff]
    %v665 = vld [vmem:[#allocation2 + $0x180] sm:$0xff]
    %v666 = vld [vmem:[#allocation2 + $0x188] sm:$0xff]
    %v667 = vld [vmem:[#allocation2 + $0x190] sm:$0xff]
    %v668 = vld [vmem:[#allocation2 + $0x198] sm:$0xff]
    %v669 = vld [vmem:[#allocation2 + $0x1a0] sm:$0xff]
    %v670 = vld [vmem:[#allocation2 + $0x1a8] sm:$0xff]
    %v671 = vld [vmem:[%s2] sm:$0xff]
    %673 = vset.pattern.permute.xlu0 0
    %674 = vperm.xlu0 %673, %v671
    %v675 = vpop.permute.xlu0 %674
    %v678 = vunpack.c.l.b16 %v616
    %v679 = vunpack.c.h.b16 %v616
    %v680 = vpack.c.b16 %v678, %v678
    %v681 = vpack.c.b16 %v679, %v679
    %v737 = vunpack.c.l.b16 %v617
    %v738 = vunpack.c.h.b16 %v617
    %v739 = vunpack.c.l.b16 %v618
    %v740 = vunpack.c.h.b16 %v618
    %v741 = vunpack.c.l.b16 %v619
    %v742 = vunpack.c.h.b16 %v619
    %v743 = vunpack.c.l.b16 %v620
    %v744 = vunpack.c.h.b16 %v620
    %v745 = vunpack.c.l.b16 %v621
    %v746 = vunpack.c.h.b16 %v621
    %v747 = vunpack.c.l.b16 %v622
    %v748 = vunpack.c.h.b16 %v622
    %v749 = vunpack.c.l.b16 %v623
    %v750 = vunpack.c.h.b16 %v623
    %v751 = vunpack.c.l.b16 %v624
    %v752 = vunpack.c.h.b16 %v624
    %v753 = vunpack.c.l.b16 %v625
    %v754 = vunpack.c.h.b16 %v625
    %v755 = vunpack.c.l.b16 %v626
    %v756 = vunpack.c.h.b16 %v626
    %v757 = vunpack.c.l.b16 %v627
    %v758 = vunpack.c.h.b16 %v627
    %v759 = vunpack.c.l.b16 %v628
    %v760 = vunpack.c.h.b16 %v628
    %v761 = vunpack.c.l.b16 %v629
    %v762 = vunpack.c.h.b16 %v629
    %v763 = vunpack.c.l.b16 %v630
    %v764 = vunpack.c.h.b16 %v630
    %v765 = vunpack.c.l.b16 %v631
    %v766 = vunpack.c.h.b16 %v631
    %v767 = vunpack.c.l.b16 %v632
    %v768 = vunpack.c.h.b16 %v632
    %v769 = vunpack.c.l.b16 %v633
    %v770 = vunpack.c.h.b16 %v633
    %v771 = vunpack.c.l.b16 %v634
    %v772 = vunpack.c.h.b16 %v634
    %v773 = vunpack.c.l.b16 %v635
    %v774 = vunpack.c.h.b16 %v635
    %v775 = vunpack.c.l.b16 %v636
    %v776 = vunpack.c.h.b16 %v636
    %v777 = vunpack.c.l.b16 %v637
    %v778 = vunpack.c.h.b16 %v637
    %v779 = vunpack.c.l.b16 %v638
    %v780 = vunpack.c.h.b16 %v638
    %v781 = vunpack.c.l.b16 %v639
    %v782 = vunpack.c.h.b16 %v639
    %v783 = vunpack.c.l.b16 %v640
    %v784 = vunpack.c.h.b16 %v640
    %v785 = vunpack.c.l.b16 %v641
    %v786 = vunpack.c.h.b16 %v641
    %v787 = vunpack.c.l.b16 %v642
    %v788 = vunpack.c.h.b16 %v642
    %v789 = vunpack.c.l.b16 %v643
    %v790 = vunpack.c.h.b16 %v643
    %v791 = vunpack.c.l.b16 %v644
    %v792 = vunpack.c.h.b16 %v644
    %v793 = vunpack.c.l.b16 %v645
    %v794 = vunpack.c.h.b16 %v645
    %v795 = vunpack.c.l.b16 %v646
    %v796 = vunpack.c.h.b16 %v646
    %v797 = vunpack.c.l.b16 %v647
    %v798 = vunpack.c.h.b16 %v647
    %v799 = vunpack.c.l.b16 %v648
    %v800 = vunpack.c.h.b16 %v648
    %v801 = vunpack.c.l.b16 %v649
    %v802 = vunpack.c.h.b16 %v649
    %v803 = vunpack.c.l.b16 %v650
    %v804 = vunpack.c.h.b16 %v650
    %v805 = vunpack.c.l.b16 %v651
    %v806 = vunpack.c.h.b16 %v651
    %v807 = vunpack.c.l.b16 %v652
    %v808 = vunpack.c.h.b16 %v652
    %v809 = vunpack.c.l.b16 %v653
    %v810 = vunpack.c.h.b16 %v653
    %v811 = vunpack.c.l.b16 %v654
    %v812 = vunpack.c.h.b16 %v654
    %v813 = vunpack.c.l.b16 %v655
    %v814 = vunpack.c.h.b16 %v655
    %v815 = vunpack.c.l.b16 %v656
    %v816 = vunpack.c.h.b16 %v656
    %v817 = vunpack.c.l.b16 %v657
    %v818 = vunpack.c.h.b16 %v657
    %v819 = vunpack.c.l.b16 %v658
    %v820 = vunpack.c.h.b16 %v658
    %v821 = vunpack.c.l.b16 %v659
    %v822 = vunpack.c.h.b16 %v659
    %v823 = vunpack.c.l.b16 %v660
    %v824 = vunpack.c.h.b16 %v660
    %v825 = vunpack.c.l.b16 %v661
    %v826 = vunpack.c.h.b16 %v661
    %v827 = vunpack.c.l.b16 %v662
    %v828 = vunpack.c.h.b16 %v662
    %v829 = vunpack.c.l.b16 %v663
    %v830 = vunpack.c.h.b16 %v663
    %v831 = vunpack.c.l.b16 %v664
    %v832 = vunpack.c.h.b16 %v664
    %v833 = vunpack.c.l.b16 %v665
    %v834 = vunpack.c.h.b16 %v665
    %v835 = vunpack.c.l.b16 %v666
    %v836 = vunpack.c.h.b16 %v666
    %v837 = vunpack.c.l.b16 %v667
    %v838 = vunpack.c.h.b16 %v667
    %v839 = vunpack.c.l.b16 %v668
    %v840 = vunpack.c.h.b16 %v668
    %v841 = vunpack.c.l.b16 %v669
    %v842 = vunpack.c.h.b16 %v669
    %v843 = vunpack.c.l.b16 %v670
    %v844 = vunpack.c.h.b16 %v670
    %v845 = vpack.c.b16 %v743, %v737
    %v846 = vpack.c.b16 %v744, %v738
    %v847 = vpack.c.b16 %v745, %v739
    %v848 = vpack.c.b16 %v746, %v740
    %v849 = vpack.c.b16 %v747, %v741
    %v850 = vpack.c.b16 %v748, %v742
    %v851 = vpack.c.b16 %v755, %v749
    %v852 = vpack.c.b16 %v756, %v750
    %v853 = vpack.c.b16 %v757, %v751
    %v854 = vpack.c.b16 %v758, %v752
    %v855 = vpack.c.b16 %v759, %v753
    %v856 = vpack.c.b16 %v760, %v754
    %v857 = vpack.c.b16 %v767, %v761
    %v858 = vpack.c.b16 %v768, %v762
    %v859 = vpack.c.b16 %v769, %v763
    %v860 = vpack.c.b16 %v770, %v764
    %v861 = vpack.c.b16 %v771, %v765
    %v862 = vpack.c.b16 %v772, %v766
    %v863 = vpack.c.b16 %v779, %v773
    %v864 = vpack.c.b16 %v780, %v774
    %v865 = vpack.c.b16 %v781, %v775
    %v866 = vpack.c.b16 %v782, %v776
    %v867 = vpack.c.b16 %v783, %v777
    %v868 = vpack.c.b16 %v784, %v778
    %v869 = vpack.c.b16 %v791, %v785
    %v870 = vpack.c.b16 %v792, %v786
    %v871 = vpack.c.b16 %v793, %v787
    %v872 = vpack.c.b16 %v794, %v788
    %v873 = vpack.c.b16 %v795, %v789
    %v874 = vpack.c.b16 %v796, %v790
    %v875 = vpack.c.b16 %v803, %v797
    %v876 = vpack.c.b16 %v804, %v798
    %v877 = vpack.c.b16 %v805, %v799
    %v878 = vpack.c.b16 %v806, %v800
    %v879 = vpack.c.b16 %v807, %v801
    %v880 = vpack.c.b16 %v808, %v802
    %v881 = vpack.c.b16 %v815, %v809
    %v882 = vpack.c.b16 %v816, %v810
    %v883 = vpack.c.b16 %v817, %v811
    %v884 = vpack.c.b16 %v818, %v812
    %v885 = vpack.c.b16 %v819, %v813
    %v886 = vpack.c.b16 %v820, %v814
    %v887 = vpack.c.b16 %v827, %v821
    %v888 = vpack.c.b16 %v828, %v822
    %v889 = vpack.c.b16 %v829, %v823
    %v890 = vpack.c.b16 %v830, %v824
    %v891 = vpack.c.b16 %v831, %v825
    %v892 = vpack.c.b16 %v832, %v826
    %v893 = vpack.c.b16 %v839, %v833
    %v894 = vpack.c.b16 %v840, %v834
    %v895 = vpack.c.b16 %v841, %v835
    %v896 = vpack.c.b16 %v842, %v836
    %v897 = vpack.c.b16 %v843, %v837
    %v898 = vpack.c.b16 %v844, %v838
    %vm953 = vcmask 130048
    %v955 = vsel %vm953, %v681, 0
    %957 = vmatprep.subr.bf16.mxu0 %v888
    %958 = vmatpush1.bf16.msra.mxu0 %v887
    %959 = vmatprep.subr.bf16.mxu0 %v882
    %960 = vmatpush1.bf16.msra.mxu0 %v881
    %961 = vmatprep.subr.bf16.mxu0 %v876
    %962 = vmatpush1.bf16.msra.mxu0 %v875
    %963 = vmatprep.subr.bf16.mxu0 %v870
    %964 = vmatpush1.bf16.msra.mxu0 %v869
    %965 = vmatprep.subr.bf16.mxu0 %v864
    %966 = vmatpush1.bf16.msra.mxu0 %v863
    %967 = vmatprep.subr.bf16.mxu0 %v858
    %968 = vmatpush1.bf16.msra.mxu0 %v857
    %969 = vmatprep.subr.bf16.mxu0 %v852
    %970 = vmatpush1.bf16.msra.mxu0 %v851
    %971 = vmatprep.subr.bf16.mxu0 %v846
    %972 = vmatpush1.bf16.msra.mxu0 %v845
    %973 = vmatprep.subr.bf16.mxu0 0
    %974 = vmatpush2.bf16.msra.mxu0 0
    %975 = vmatprep.subr.bf16.mxu0 0
    %976 = vmatpush2.bf16.msra.mxu0 0
    %977 = vmatprep.subr.bf16.mxu0 0
    %978 = vmatpush2.bf16.msra.mxu0 0
    %979 = vmatprep.subr.bf16.mxu0 0
    %980 = vmatpush2.bf16.msra.mxu0 0
    %981 = vmatprep.subr.bf16.mxu0 0
    %982 = vmatpush2.bf16.msra.mxu0 0
    %983 = vmatprep.subr.bf16.mxu0 0
    %984 = vmatpush2.bf16.msra.mxu0 0
    %985 = vmatprep.subr.bf16.mxu0 0
    %986 = vmatpush2.bf16.msra.mxu0 0
    %987 = vmatprep.subr.bf16.mxu0 %v894
    %988 = vmatpush2.bf16.msra.mxu0 %v893
    %989 = vmatprep.mubr.bf16.mxu0 %v955
    %990 = vmatmul.mubr.bf16.gmra.mxu0 %v680
    %v991 = vpop.f32.mrf.mxu0
    %v992 = vadd.f32 %v675, %v991
    %v993 = vpop.f32.mrf.mxu0
    %v994 = vadd.f32 %v675, %v993
    %v995 = vpop.f32.mrf.mxu0
    %v996 = vpop.f32.mrf.mxu0
    %997 = vdwg.mxu0
    %998 = vmatprep.subr.bf16.mxu0 %v890
    %999 = vmatpush1.bf16.msra.mxu0 %v889
    %1000 = vmatprep.subr.bf16.mxu0 %v884
    %1001 = vmatpush1.bf16.msra.mxu0 %v883
    %1002 = vmatprep.subr.bf16.mxu0 %v878
    %1003 = vmatpush1.bf16.msra.mxu0 %v877
    %1004 = vmatprep.subr.bf16.mxu0 %v872
    %1005 = vmatpush1.bf16.msra.mxu0 %v871
    %1006 = vmatprep.subr.bf16.mxu0 %v866
    %1007 = vmatpush1.bf16.msra.mxu0 %v865
    %1008 = vmatprep.subr.bf16.mxu0 %v860
    %1009 = vmatpush1.bf16.msra.mxu0 %v859
    %1010 = vmatprep.subr.bf16.mxu0 %v854
    %1011 = vmatpush1.bf16.msra.mxu0 %v853
    %1012 = vmatprep.subr.bf16.mxu0 %v848
    %1013 = vmatpush1.bf16.msra.mxu0 %v847
    %1014 = vmatprep.subr.bf16.mxu0 0
    %1015 = vmatpush2.bf16.msra.mxu0 0
    %1016 = vmatprep.subr.bf16.mxu0 0
    %1017 = vmatpush2.bf16.msra.mxu0 0
    %1018 = vmatprep.subr.bf16.mxu0 0
    %1019 = vmatpush2.bf16.msra.mxu0 0
    %1020 = vmatprep.subr.bf16.mxu0 0
    %1021 = vmatpush2.bf16.msra.mxu0 0
    %1022 = vmatprep.subr.bf16.mxu0 0
    %1023 = vmatpush2.bf16.msra.mxu0 0
    %1024 = vmatprep.subr.bf16.mxu0 0
    %1025 = vmatpush2.bf16.msra.mxu0 0
    %1026 = vmatprep.subr.bf16.mxu0 0
    %1027 = vmatpush2.bf16.msra.mxu0 0
    %1028 = vmatprep.subr.bf16.mxu0 %v896
    %1029 = vmatpush2.bf16.msra.mxu0 %v895
    %1030 = vmatprep.mubr.bf16.mxu0 %v955
    %1031 = vmatmul.mubr.bf16.gmra.mxu0 %v680
    %v1032 = vpop.f32.mrf.mxu0
    %v1033 = vadd.f32 %v675, %v1032
    %v1034 = vpop.f32.mrf.mxu0
    %v1035 = vadd.f32 %v675, %v1034
    %v1036 = vpop.f32.mrf.mxu0
    %v1037 = vpop.f32.mrf.mxu0
    %1038 = vdwg.mxu0
    %1039 = vmatprep.subr.bf16.mxu0 %v892
    %1040 = vmatpush1.bf16.msra.mxu0 %v891
    %1041 = vmatprep.subr.bf16.mxu0 %v886
    %1042 = vmatpush1.bf16.msra.mxu0 %v885
    %1043 = vmatprep.subr.bf16.mxu0 %v880
    %1044 = vmatpush1.bf16.msra.mxu0 %v879
    %1045 = vmatprep.subr.bf16.mxu0 %v874
    %1046 = vmatpush1.bf16.msra.mxu0 %v873
    %1047 = vmatprep.subr.bf16.mxu0 %v868
    %1048 = vmatpush1.bf16.msra.mxu0 %v867
    %1049 = vmatprep.subr.bf16.mxu0 %v862
    %1050 = vmatpush1.bf16.msra.mxu0 %v861
    %1051 = vmatprep.subr.bf16.mxu0 %v856
    %1052 = vmatpush1.bf16.msra.mxu0 %v855
    %1053 = vmatprep.subr.bf16.mxu0 %v850
    %1054 = vmatpush1.bf16.msra.mxu0 %v849
    %1055 = vmatprep.subr.bf16.mxu0 0
    %1056 = vmatpush2.bf16.msra.mxu0 0
    %1057 = vmatprep.subr.bf16.mxu0 0
    %1058 = vmatpush2.bf16.msra.mxu0 0
    %1059 = vmatprep.subr.bf16.mxu0 0
    %1060 = vmatpush2.bf16.msra.mxu0 0
    %1061 = vmatprep.subr.bf16.mxu0 0
    %1062 = vmatpush2.bf16.msra.mxu0 0
    %1063 = vmatprep.subr.bf16.mxu0 0
    %1064 = vmatpush2.bf16.msra.mxu0 0
    %1065 = vmatprep.subr.bf16.mxu0 0
    %1066 = vmatpush2.bf16.msra.mxu0 0
    %1067 = vmatprep.subr.bf16.mxu0 0
    %1068 = vmatpush2.bf16.msra.mxu0 0
    %1069 = vmatprep.subr.bf16.mxu0 %v898
    %1070 = vmatpush2.bf16.msra.mxu0 %v897
    %1071 = vmatprep.mubr.bf16.mxu0 %v955
    %1072 = vmatmul.mubr.bf16.gmra.mxu0 %v680
    %v1073 = vpop.f32.mrf.mxu0
    %v1074 = vadd.f32 %v675, %v1073
    %v1075 = vpop.f32.mrf.mxu0
    %v1076 = vadd.f32 %v675, %v1075
    %v1077 = vpop.f32.mrf.mxu0
    %v1078 = vpop.f32.mrf.mxu0
    %1079 = vdwg.mxu0
    %vm1080 = vcmp.ge.f32.partialorder %v992, 0.0
    %vm1081 = vcmp.ge.f32.partialorder %v994, 0.0
    %vm1082 = vcmp.ge.f32.partialorder %v1033, 0.0
    %vm1083 = vcmp.ge.f32.partialorder %v1035, 0.0
    %vm1084 = vcmp.ge.f32.partialorder %v1074, 0.0
    %vm1085 = vcmp.ge.f32.partialorder %v1076, 0.0
    %v1086 = vmul.f32 %v992, 0.2
    %v1087 = vmul.f32 %v994, 0.2
    %v1088 = vmul.f32 %v1033, 0.2
    %v1089 = vmul.f32 %v1035, 0.2
    %v1090 = vmul.f32 %v1074, 0.2
    %v1091 = vmul.f32 %v1076, 0.2
    %v1092 = vsel %vm1080, %v992, %v1086
    %v1093 = vsel %vm1081, %v994, %v1087
    %v1094 = vsel %vm1082, %v1033, %v1088
    %v1095 = vsel %vm1083, %v1035, %v1089
    %v1096 = vsel %vm1084, %v1074, %v1090
    %v1097 = vsel %vm1085, %v1076, %v1091
    %v1098 = vld [vmem:[%s5] sm:$0x3f]
    %v1100 = vlaneseq
    %v1101 = vshrl.u32 %v1100, 7
    %v1102 = vsub.s32 0, %v1101
    %v1103 = vrot.slane %v1098, %v1102
    %v1104 = vlaneseq
    %v1105 = vshrl.u32 %v1104, 7
    %v1106 = vsub.s32 1, %v1105
    %v1107 = vrot.slane %v1098, %v1106
    %v1108 = vlaneseq
    %v1109 = vshrl.u32 %v1108, 7
    %v1110 = vsub.s32 2, %v1109
    %v1111 = vrot.slane %v1098, %v1110
    %v1112 = vlaneseq
    %v1113 = vshrl.u32 %v1112, 7
    %v1114 = vsub.s32 3, %v1113
    %v1115 = vrot.slane %v1098, %v1114
    %v1116 = vlaneseq
    %v1117 = vshrl.u32 %v1116, 7
    %v1118 = vsub.s32 4, %v1117
    %v1119 = vrot.slane %v1098, %v1118
    %v1120 = vlaneseq
    %v1121 = vshrl.u32 %v1120, 7
    %v1122 = vsub.s32 5, %v1121
    %v1123 = vrot.slane %v1098, %v1122
    %v1130 = vmul.f32 %v1092, %v1103
    %v1131 = vmul.f32 %v1093, %v1107
    %v1132 = vmul.f32 %v1094, %v1111
    %v1133 = vmul.f32 %v1095, %v1115
    %v1134 = vmul.f32 %v1096, %v1119
    %v1135 = vmul.f32 %v1097, %v1123
    %v1136 = vld [vmem:[#allocation3] sm:$0xff]
    %v1137 = vadd.f32 %v1130, %v1131
    %v1138 = vadd.f32 %v1137, %v1132
    %v1139 = vadd.f32 %v1138, %v1133
    %v1140 = vadd.f32 %v1139, %v1134
    %v1141 = vadd.f32 %v1140, %v1135
    %1142 = vadd.xlane.f32.xlu0 %v1141
    %v1143 = vpop.xlane.xlu0 %1142
    %v1144 = vadd.f32 %v1136, %v1143
    %vm1145 = vcmask 7168
    %1146 = vst.msk [vmem:[#allocation3] sm:$0xff] %vm1145, %v1144
    %v1147 = vld [vmem:[#allocation4] sm:$0xff]
    %v1148 = vmul.f32 %v1130, %v1130
    %v1149 = vmul.f32 %v1131, %v1131
    %v1150 = vmul.f32 %v1132, %v1132
    %v1151 = vmul.f32 %v1133, %v1133
    %v1152 = vmul.f32 %v1134, %v1134
    %v1153 = vmul.f32 %v1135, %v1135
    %v1154 = vadd.f32 %v1148, %v1149
    %v1155 = vadd.f32 %v1154, %v1150
    %v1156 = vadd.f32 %v1155, %v1151
    %v1157 = vadd.f32 %v1156, %v1152
    %v1158 = vadd.f32 %v1157, %v1153
    %1159 = vadd.xlane.f32.xlu0 %v1158
    %v1160 = vpop.xlane.xlu0 %1159
    %v1161 = vadd.f32 %v1147, %v1160
    %1162 = vst.msk [vmem:[#allocation4] sm:$0xff] %vm1145, %v1161
    %s1163 = smul.u32 0, 2
    %s1164 = smul.u32 %s1163, 3
    %s1165 = smul.addr %s1164, 8
    %s1166 = scalar_lea.vmem [#allocation8], %s1165
    %1167 = vst [vmem:[%s1166] sm:$0xff] %v1092
    %1168 = vst [vmem:[%s1166 + $0x8] sm:$0xff] %v1093
    %1169 = vst [vmem:[%s1166 + $0x10] sm:$0xff] %v1094
    %s1170 = sadd.s32 %s1163, 1
    %s1171 = smul.u32 %s1170, 3
    %s1172 = smul.addr %s1171, 8
    %s1173 = scalar_lea.vmem [#allocation8], %s1172
    %1174 = vst [vmem:[%s1173] sm:$0xff] %v1095
    %1175 = vst [vmem:[%s1173 + $0x8] sm:$0xff] %v1096
    %1176 = vst [vmem:[%s1173 + $0x10] sm:$0xff] %v1097
    // Predicated region
    $region34: #{tpu_custom_call.1} parent=1 // pred_check
      %p1177 = pneg %p39
    $region35: #{tpu_custom_call.1} parent=1 // pred_check_branch
      %1179 = sbr.rel (%p1177) target = $region37
    $region36: #{tpu_custom_call.1} parent=1 // pred_region
      %v1180 = vld [vmem:[#allocation3] sm:$0xff]
      %v1181 = vmul.f32 %v1180, 0.001953125
      %v1182 = vld [vmem:[#allocation4] sm:$0xff]
      %v1183 = vmul.f32 %v1182, 0.001953125
      %v1184 = vmul.f32 %v1181, %v1181
      %v1185 = vsub.f32 %v1183, %v1184
      %v1186 = vadd.f32 %v1185, 1e-05
      %v1187 = vrsqrt.pop %v1186
      %v1188 = vld [vmem:[%s3] sm:$0xff]
      %v1189 = vmul.f32 %v1188, %v1187
      %v1190 = vld [vmem:[%s4] sm:$0xff]
      %v1191 = vmul.f32 %v1181, %v1189
      %v1192 = vsub.f32 %v1190, %v1191
      %v1193 = vld [vmem:[#allocation8] sm:$0xff]
      %v1194 = vld [vmem:[#allocation8 + $0x8] sm:$0xff]
      %v1195 = vld [vmem:[#allocation8 + $0x10] sm:$0xff]
      %v1196 = vld [vmem:[#allocation8 + $0x18] sm:$0xff]
      %v1197 = vld [vmem:[#allocation8 + $0x20] sm:$0xff]
      %v1198 = vld [vmem:[#allocation8 + $0x28] sm:$0xff]
      %1200 = vset.pattern.permute.xlu0 0
      %1201 = vperm.xlu0 %1200, %v1189
      %v1202 = vpop.permute.xlu0 %1201
      %v1204 = vmul.f32 %v1193, %v1202
      %v1205 = vmul.f32 %v1194, %v1202
      %v1206 = vmul.f32 %v1195, %v1202
      %v1207 = vmul.f32 %v1196, %v1202
      %v1208 = vmul.f32 %v1197, %v1202
      %v1209 = vmul.f32 %v1198, %v1202
      %1211 = vset.pattern.permute.xlu0 0
      %1212 = vperm.xlu0 %1211, %v1192
      %v1213 = vpop.permute.xlu0 %1212
      %v1215 = vadd.f32 %v1204, %v1213
      %v1216 = vadd.f32 %v1205, %v1213
      %v1217 = vadd.f32 %v1206, %v1213
      %v1218 = vadd.f32 %v1207, %v1213
      %v1219 = vadd.f32 %v1208, %v1213
      %v1220 = vadd.f32 %v1209, %v1213
      %1221 = vst [vmem:[#allocation8] sm:$0xff] %v1215
      %1222 = vst [vmem:[#allocation8 + $0x8] sm:$0xff] %v1216
      %1223 = vst [vmem:[#allocation8 + $0x10] sm:$0xff] %v1217
      %1224 = vst [vmem:[#allocation8 + $0x18] sm:$0xff] %v1218
      %1225 = vst [vmem:[#allocation8 + $0x20] sm:$0xff] %v1219
      %1226 = vst [vmem:[#allocation8 + $0x28] sm:$0xff] %v1220
    $region37: #{tpu_custom_call.1} parent=1 // pred_fallthru
      _
    // Predicated region
    $region38: #{tpu_custom_call.1} parent=1 // pred_check
      _
    $region39: #{tpu_custom_call.1} parent=1 // pred_check_branch
      %1228 = sbr.rel (0) target = $region41
    $region40: #{tpu_custom_call.1} parent=1 // pred_region
      %s1230 = ssub.s32 768, 768
      %1231 = vsyncadd [#allocation7], %s1230
      %s1232 = sshll.u32 [#allocation8], 4
      %s1233 = int_to_ptr.vmem [resolvable:$true] %s1232
      %1238 = dma.vmem_to_hbm [thread:$0]  %s1233, 768, %s6, [#allocation7], 384, 384, 24
    $region41: #{tpu_custom_call.1} parent=1 // pred_fallthru
      _
    // Predicated region
    $region42: #{tpu_custom_call.1} parent=1 // pred_check
      _
    $region43: #{tpu_custom_call.1} parent=1 // pred_check_branch
      %1240 = sbr.rel (0) target = $region45
    $region44: #{tpu_custom_call.1} parent=1 // pred_region
      %1241 = dma.done [#allocation7], 768
    $region45: #{tpu_custom_call.1} parent=1 // pred_fallthru
      _
    %1242 = vsyncpa [#allocation6], 1
    %1243 = vsyncpa [#allocation7], 1

</llo_original>
